<compile_context>
chip_gen: v7x
topology: tpu7x:2x2x1
jax: 0.10.0
libtpu: 0.0.40
codegen_flags: <defaults>
</compile_context>

<pallas_src>
import jax
import jax.numpy as jnp
from jax.experimental import pallas as pl
from jax.experimental.pallas import tpu as pltpu


# ----------------------------------------------------------------------------- kernel

def action_proposal_kernel(x_ref, feat_ref, wspblk_ref, onesblk_ref, w1srep_ref,
                           w1ta_ref, b1_ref, w2_ref, b2_ref, act_ref, spat_ref):
    """One batch-block step.

    x_ref      : [TB*C, S]   state block, NATIVE dtype, rows ordered (b*C + c)
    feat_ref   : [TB, TAp]   concat(task, prev_action), lane-padded to 128 (f32)
    wspblk_ref : [TB, TB*C]  kron(I_TB, wsp), state dtype — spatial 1x1 conv as one 2-D matmul
    onesblk_ref: [TB, TB*C]  kron(I_TB, ones(1,C)) — per-batch channel reduction (f32)
    w1srep_ref : [TB*C, H]   (w1s / S) tiled TB times along rows (f32)
    w1ta_ref   : [TAp, H]    [w1t; w1a; 0] (f32)
    b1_ref     : [1, H]
    w2_ref     : [H, Apad]   action head, lane-padded to a multiple of 128
    b2_ref     : [1, Apad]   padded lanes hold -1e30 -> exactly 0 probability
    act_ref    : [TB, Apad]  action-type probabilities (padded slab)
    spat_ref   : [TB, S]     spatial-argument probabilities
    """
    x = x_ref[...]                                             # native dtype; no f32 copy

    # ---- spatial-argument head: 1x1 conv over C on the MXU, softmax over S (lane-dense) ----
    sp_logits = jnp.dot(wspblk_ref[...], x,
                        preferred_element_type=jnp.float32)    # [TB, S] f32 accumulation
    sp_max = jnp.max(sp_logits, axis=-1, keepdims=True)
    sp_exp = jnp.exp(sp_logits - sp_max)
    sp_inv = pl.reciprocal(jnp.sum(sp_exp, axis=-1, keepdims=True), approx=False)
    spat_ref[...] = (sp_exp * sp_inv).astype(spat_ref.dtype)

    # ---- action-type head ----
    # global average pool: lane (XLU) sum over S with f32 accumulation; 1/S folded into w1s_rep.
    rowsum = jnp.sum(x, axis=-1, keepdims=True, dtype=jnp.float32)       # [TB*C, 1]
    # pooled @ (w1s/S) without a [TB*C,1]->[TB,C] relayout: scale the replicated weight rows by
    # the per-row sums and reduce each batch block with a block-diag MXU matmul.
    h = (jnp.dot(onesblk_ref[...], rowsum * w1srep_ref[...],
                 preferred_element_type=jnp.float32)
         + jnp.dot(feat_ref[...], w1ta_ref[...],
                   preferred_element_type=jnp.float32)
         + b1_ref[...])
    h = jnp.maximum(h, 0.0)                                    # ReLU

    logits = jnp.dot(h, w2_ref[...],
                     preferred_element_type=jnp.float32) + b2_ref[...]   # [TB, Apad]
    m = jnp.max(logits, axis=-1, keepdims=True)
    e = jnp.exp(logits - m)                                    # padded lanes: exp(-1e30 - m) == 0
    inv = pl.reciprocal(jnp.sum(e, axis=-1, keepdims=True), approx=False)
    act_ref[...] = (e * inv).astype(act_ref.dtype)


# ----------------------------------------------------------------------------- tiling helpers

def _round_up(x, m):
    return ((x + m - 1) // m) * m


def _sublane_multiple(itemsize):
    # f32 -> 8 sublanes, bf16 -> 16, int8/fp8 -> 32 (sub-32-bit packing along sublanes).
    return 8 * max(1, 4 // int(itemsize))


def _valid_block_bs(B, C, sub):
    tbs = [d for d in range(1, B + 1) if B % d == 0 and (d * C) % sub == 0]
    if B not in tbs:
        tbs.append(B)   # block dim == full array dim is always layout-legal
    return sorted(tbs)


def _choose_block_b(B, C, S, itemsize, sub, *, target_bytes=2 << 20, max_bytes=8 << 20):
    """Pick TB so the per-step state DMA is ~target_bytes (capped) and TB | B (no pad copy)."""
    tbs = _valid_block_bs(B, C, sub)
    blk = lambda tb: tb * C * S * itemsize
    fitting = [tb for tb in tbs if blk(tb) <= max_bytes] or [tbs[0]]
    big = [tb for tb in fitting if blk(tb) >= target_bytes]
    # smallest block >= target keeps many grid steps for large batches (feeds both v7x TCs);
    # otherwise take the largest block that still fits (tiny-batch case).
    return min(big) if big else max(fitting)


def _coerce_block_b(requested, B, C, sub):
    tbs = _valid_block_bs(B, C, sub)
    ok = [tb for tb in tbs if tb <= max(1, min(int(requested), B))]
    return max(ok) if ok else B


# ----------------------------------------------------------------------------- weight prep (cacheable)

def prepare_action_proposal_params(params, *, block_b, spatial_size, state_dtype=jnp.float32):
    """Build the fused / padded weight operands once per (params, TB, S, state dtype)."""
    f32 = jnp.float32
    TB = int(block_b)
    S = int(spatial_size)
    C, hidden = params["w1s"].shape
    T = params["w1t"].shape[0]
    A = params["w1a"].shape[0]

    w1s = jnp.asarray(params["w1s"], f32)                     # [C, hidden]
    w1t = jnp.asarray(params["w1t"], f32)                     # [T, hidden]
    w1a = jnp.asarray(params["w1a"], f32)                     # [A, hidden]
    b1 = jnp.asarray(params["b1"], f32).reshape(1, hidden)
    w2 = jnp.asarray(params["w2"], f32)                       # [hidden, A]
    b2 = jnp.asarray(params["b2"], f32).reshape(1, A)
    wsp = jnp.asarray(params["wsp"], f32).reshape(1, C)

    # Fused-concat Linear: pre-concat (task, prev_action) halves of W1, lane-pad K to 128.
    TA = T + A
    TA_pad = _round_up(TA, 128)
    w1ta = jnp.concatenate([w1t, w1a], axis=0)                           # [T+A, hidden]
    w1ta_p = jnp.zeros((TA_pad, hidden), f32).at[:TA].set(w1ta)

    # Fold the 1/S of the average pool into the replicated state half of W1.
    w1s_rep = jnp.tile(w1s * (1.0 / S), (TB, 1))                         # [TB*C, hidden]
    ones_blk = jnp.kron(jnp.eye(TB, dtype=f32), jnp.ones((1, C), f32))   # [TB, TB*C]
    # Spatial 1x1 conv as ONE 2-D MXU matmul; kept in the state's native dtype so the state
    # tile never needs an in-kernel f32 cast.
    wsp_blk = jnp.kron(jnp.eye(TB, dtype=f32), wsp).astype(state_dtype)  # [TB, TB*C]

    # Lane-dense action head: pad num_actions to a multiple of 128; padded logits get a -1e30
    # bias so their probability is exactly 0 and real lanes still sum to 1 (math stays f32).
    A_pad = _round_up(A, 128)
    w2p = jnp.zeros((hidden, A_pad), f32).at[:, :A].set(w2)
    b2p = jnp.full((1, A_pad), -1e30, dtype=f32).at[:, :A].set(b2)

    return dict(TB=TB, C=C, S=S, T=T, A=A, TA=TA, TA_pad=TA_pad, hidden=hidden, A_pad=A_pad,
                state_dtype=jnp.dtype(state_dtype),
                wsp_blk=wsp_blk, ones_blk=ones_blk, w1s_rep=w1s_rep, w1ta=w1ta_p,
                b1=b1, w2=w2p, b2=b2p)


# ----------------------------------------------------------------------------- forward

def action_proposal_forward(state_nchw, task, prev_action, params=None, *,
                            block_b=None, prepared=None, out_dtype=jnp.float32):
    """state_nchw: [B, C, H, W] (PyTorch NCHW, native dtype), task: [B, T], prev_action: [B, A].

    Returns (action_type_probs [B, A], spatial_arg_probs [B, H*W]) in `out_dtype`
    (pass jnp.bfloat16 on v5e to halve the store-side HBM traffic).
    """
    B, C, H, W = state_nchw.shape
    S = H * W
    state_dtype = state_nchw.dtype
    itemsize = jnp.dtype(state_dtype).itemsize
    sub = _sublane_multiple(itemsize)
    f32 = jnp.float32

    if prepared is not None and (
            prepared["C"] != C or prepared["S"] != S
            or jnp.dtype(prepared["state_dtype"]) != jnp.dtype(state_dtype)
            or B % prepared["TB"] != 0):
        prepared = None                                        # stale cache -> rebuild
    if prepared is None:
        if params is None:
            raise ValueError("need `params` when no matching `prepared` weights are given")
        TB = (_choose_block_b(B, C, S, itemsize, sub) if block_b is None
              else _coerce_block_b(block_b, B, C, sub))
        prepared = prepare_action_proposal_params(params, block_b=TB, spatial_size=S,
                                                  state_dtype=state_dtype)
    TB = prepared["TB"]
    TA, TA_pad = prepared["TA"], prepared["TA_pad"]
    hidden, A, A_pad = prepared["hidden"], prepared["A"], prepared["A_pad"]

    # State stays in its native dtype; NCHW -> [B*C, S] is a free, contiguity-preserving reshape.
    # No batch pad is ever materialized: TB always divides B (or equals B).
    x2d = state_nchw.reshape(B * C, S)
    feat = jnp.zeros((B, TA_pad), f32).at[:, :TA].set(
        jnp.concatenate([task, prev_action], axis=-1).astype(f32))       # lane-dense [B, TAp]

    operands = (x2d, feat, prepared["wsp_blk"], prepared["ones_blk"], prepared["w1s_rep"],
                prepared["w1ta"], prepared["b1"], prepared["w2"], prepared["b2"])

    out_itemsize = jnp.dtype(out_dtype).itemsize
    out_shape = (jax.ShapeDtypeStruct((B, A_pad), out_dtype),  # action-type probs (padded slab)
                 jax.ShapeDtypeStruct((B, S), out_dtype))      # spatial-argument probs
    out_specs = [pl.BlockSpec((TB, A_pad), lambda i: (i, 0)),
                 pl.BlockSpec((TB, S), lambda i: (i, 0))]

    resident_shapes = [(TB, TB * C), (TB, TB * C), (TB * C, hidden),
                       (TA_pad, hidden), (1, hidden), (hidden, A_pad), (1, A_pad)]
    resident_bytes = sum(int(op.size) * op.dtype.itemsize for op in operands[2:])
    state_blk_bytes = TB * C * S * itemsize
    feat_blk_bytes = TB * TA_pad * 4
    out_blk_bytes = (TB * A_pad + TB * S) * out_itemsize

    # Advisory cost so XLA can overlap the surrounding graph with this mem-bound custom call.
    bytes_accessed = sum(int(op.size) * op.dtype.itemsize for op in operands)
    bytes_accessed += (B * A_pad + B * S) * out_itemsize
    flops = int(2 * B * C * S + B * C * S                      # 1x1 conv + pooling
                + 2 * B * (C + TA_pad) * hidden + 2 * B * hidden * A_pad)
    cost = pl.CostEstimate(flops=flops, transcendentals=int(B * (S + A_pad)),
                           bytes_accessed=int(bytes_accessed))

    # Per-generation VMEM budget: size the limit from the actual blocks, cap at ~75% of physical
    # (~96 MiB on v5e/v6e, ~48 MiB on v7x).
    try:
        vmem_cap = int(pltpu.get_tpu_info().vmem_capacity_bytes)
    except Exception:
        vmem_cap = 128 << 20

    def _call(single_buffer_residents):
        def resident(shape):
            # Grid-invariant weights: no point double-buffering them (reclaims VMEM on v7x).
            if single_buffer_residents:
                return pl.BlockSpec(shape, lambda i: (0, 0), pipeline_mode=pl.Buffered(1))
            return pl.BlockSpec(shape, lambda i: (0, 0))

        in_specs = [
            pl.BlockSpec((TB * C, S), lambda i: (i, 0)),       # state block (pipelined over batch)
            pl.BlockSpec((TB, TA_pad), lambda i: (i, 0)),      # task | prev_action block
        ] + [resident(shape) for shape in resident_shapes]

        resid_factor = 1 if single_buffer_residents else 2
        need = (2 * (state_blk_bytes + feat_blk_bytes + out_blk_bytes)
                + resid_factor * resident_bytes + (4 << 20))   # + headroom for internal scratch
        vmem_limit = int(min(max(need, 32 << 20), int(0.75 * vmem_cap)))

        fn = pl.pallas_call(
            action_proposal_kernel,
            out_shape=out_shape,
            grid=(B // TB,),
            in_specs=in_specs,
            out_specs=out_specs,
            compiler_params=pltpu.CompilerParams(
                dimension_semantics=("parallel",),             # megacore / 2-TC sharding over batch
                vmem_limit_bytes=vmem_limit),
            cost_estimate=cost,
        )
        return fn(*operands)

    if hasattr(pl, "Buffered"):
        try:
            act_pad, spat = _call(True)
            jax.block_until_ready((act_pad, spat))             # surface any async failure here
            return act_pad[:, :A], spat
        except Exception:
            pass  # pipeline_mode / buffer_count=1 unsupported on this JAX: use default buffering
    act_pad, spat = _call(False)
    return act_pad[:, :A], spat


def uniform_probs(length: int):
    # ActionProposal._uniform — trivial, kept in plain JAX.
    return jnp.full((length,), 1.0 / float(length), dtype=jnp.float32)


# ----------------------------------------------------------------------------- reference & demo

def _reference(state_nchw, task, prev_action, params):
    B, C, H, W = state_nchw.shape
    x = state_nchw.astype(jnp.float32).reshape(B, C, H * W)
    pooled = jnp.mean(x, axis=-1)
    feat = jnp.concatenate([pooled, task, prev_action], axis=-1)
    w1 = jnp.concatenate([params["w1s"], params["w1t"], params["w1a"]], axis=0)
    h = jnp.maximum(feat @ w1 + params["b1"], 0.0)
    logits = h @ params["w2"] + params["b2"]
    act = jax.nn.softmax(logits, axis=-1)
    sp_logits = jnp.einsum("bcs,oc->bs", x, params["wsp"])
    spat = jax.nn.softmax(sp_logits, axis=-1)
    return act, spat


if __name__ == "__main__":
    # Small, module-consistent shapes.
    B, C, H, W = 2, 4, 16, 16          # state features [B, C, H, W] (NCHW)
    T = 32                             # task embedding dim
    A = 8                              # number of action types
    HIDDEN = 32

    key = jax.random.PRNGKey(0)
    ks = jax.random.split(key, 12)

    state = jax.random.normal(ks[0], (B, C, H, W), dtype=jnp.float32)
    task = jax.random.normal(ks[1], (B, T), dtype=jnp.float32)
    prev_action = jax.nn.one_hot(
        jax.random.randint(ks[2], (B,), 0, A), A, dtype=jnp.float32)

    params = {
        "w1s": 0.1 * jax.random.normal(ks[3], (C, HIDDEN), dtype=jnp.float32),
        "w1t": 0.1 * jax.random.normal(ks[4], (T, HIDDEN), dtype=jnp.float32),
        "w1a": 0.1 * jax.random.normal(ks[5], (A, HIDDEN), dtype=jnp.float32),
        "b1": jnp.zeros((1, HIDDEN), dtype=jnp.float32),
        "w2": 0.1 * jax.random.normal(ks[6], (HIDDEN, A), dtype=jnp.float32),
        "b2": jnp.zeros((1, A), dtype=jnp.float32),
        "wsp": 0.1 * jax.random.normal(ks[7], (1, C), dtype=jnp.float32),
    }

    # --- case 1: tiny batch, auto block size (TB == B, single grid step, no padding) ---
    act_probs, spatial_probs = action_proposal_forward(state, task, prev_action, params)
    jax.block_until_ready((act_probs, spatial_probs))
    ref_act, ref_spat = _reference(state, task, prev_action, params)
    assert act_probs.shape == (B, A) and spatial_probs.shape == (B, H * W)
    assert jnp.allclose(act_probs, ref_act, atol=1e-5, rtol=1e-5)
    assert jnp.allclose(spatial_probs, ref_spat, atol=1e-5, rtol=1e-5)
    assert jnp.allclose(jnp.sum(act_probs, axis=-1), 1.0, atol=1e-5)
    assert jnp.allclose(jnp.sum(spatial_probs, axis=-1), 1.0, atol=1e-5)

    # --- case 2: multi-step pipelined ("parallel") grid with cached prepared weights ---
    B2 = 16
    state2 = jax.random.normal(ks[8], (B2, C, H, W), dtype=jnp.float32)
    task2 = jax.random.normal(ks[9], (B2, T), dtype=jnp.float32)
    prev2 = jax.nn.one_hot(
        jax.random.randint(ks[10], (B2,), 0, A), A, dtype=jnp.float32)
    prep8 = prepare_action_proposal_params(params, block_b=8, spatial_size=H * W,
                                           state_dtype=state2.dtype)
    act2, spat2 = action_proposal_forward(state2, task2, prev2, params,
                                          block_b=8, prepared=prep8)
    jax.block_until_ready((act2, spat2))
    ref_act2, ref_spat2 = _reference(state2, task2, prev2, params)
    assert jnp.allclose(act2, ref_act2, atol=1e-5, rtol=1e-5)
    assert jnp.allclose(spat2, ref_spat2, atol=1e-5, rtol=1e-5)
    assert jnp.allclose(jnp.sum(act2, axis=-1), 1.0, atol=1e-5)
    assert jnp.allclose(jnp.sum(spat2, axis=-1), 1.0, atol=1e-5)

    # --- case 3: bf16 outputs (v5e store-bandwidth saving path), looser tolerance ---
    act3, spat3 = action_proposal_forward(state, task, prev_action, params,
                                          out_dtype=jnp.bfloat16)
    jax.block_until_ready((act3, spat3))
    assert act3.dtype == jnp.bfloat16 and spat3.dtype == jnp.bfloat16
    assert jnp.allclose(act3.astype(jnp.float32), ref_act, atol=2e-2)
    assert jnp.allclose(spat3.astype(jnp.float32), ref_spat, atol=2e-2)
    assert jnp.allclose(jnp.sum(act3.astype(jnp.float32), axis=-1), 1.0, atol=2e-2)
    assert jnp.allclose(jnp.sum(spat3.astype(jnp.float32), axis=-1), 1.0, atol=2e-2)

    _ = uniform_probs(A)  # ActionProposal._uniform equivalent

    print("KERNEL_OK")
</pallas_src>

<mosaic_0001>
module attributes {stable_mosaic.version = 11 : i64} {
  func.func @action_proposal_kernel(%arg0: i32, %arg1: memref<8x256xf32, #tpu.memory_space<vmem>>, %arg2: memref<2x128xf32, #tpu.memory_space<vmem>>, %arg3: memref<2x8xf32, #tpu.memory_space<vmem>>, %arg4: memref<2x8xf32, #tpu.memory_space<vmem>>, %arg5: memref<8x32xf32, #tpu.memory_space<vmem>>, %arg6: memref<128x32xf32, #tpu.memory_space<vmem>>, %arg7: memref<1x32xf32, #tpu.memory_space<vmem>>, %arg8: memref<32x128xf32, #tpu.memory_space<vmem>>, %arg9: memref<1x128xf32, #tpu.memory_space<vmem>>, %arg10: memref<2x128xf32, #tpu.memory_space<vmem>>, %arg11: memref<2x256xf32, #tpu.memory_space<vmem>>) attributes {dimension_semantics = [#tpu.dimension_semantics<parallel>], iteration_bounds = array<i64: 1>, scalar_prefetch = 0 : i64, scratch_operands = 0 : i64, tpu.core_type = #tpu.core_type<tc>, window_params = [{transform_indices = @transform_0, window_bounds = array<i64: 8, 256>}, {transform_indices = @transform_1, window_bounds = array<i64: 2, 128>}, {pipeline_mode = #tpu.pipeline_mode<synchronous>, transform_indices = @transform_2, window_bounds = array<i64: 2, 8>}, {pipeline_mode = #tpu.pipeline_mode<synchronous>, transform_indices = @transform_3, window_bounds = array<i64: 2, 8>}, {pipeline_mode = #tpu.pipeline_mode<synchronous>, transform_indices = @transform_4, window_bounds = array<i64: 8, 32>}, {pipeline_mode = #tpu.pipeline_mode<synchronous>, transform_indices = @transform_5, window_bounds = array<i64: 128, 32>}, {pipeline_mode = #tpu.pipeline_mode<synchronous>, transform_indices = @transform_6, window_bounds = array<i64: 1, 32>}, {pipeline_mode = #tpu.pipeline_mode<synchronous>, transform_indices = @transform_7, window_bounds = array<i64: 32, 128>}, {pipeline_mode = #tpu.pipeline_mode<synchronous>, transform_indices = @transform_8, window_bounds = array<i64: 1, 128>}, {transform_indices = @transform_9, window_bounds = array<i64: 2, 128>}, {transform_indices = @transform_10, window_bounds = array<i64: 2, 256>}]} {
    %c0 = arith.constant 0 : index
    %c0_0 = arith.constant 0 : index
    %0 = vector.load %arg1[%c0, %c0_0] : memref<8x256xf32, #tpu.memory_space<vmem>>, vector<8x256xf32>
    %c0_1 = arith.constant 0 : index
    %c0_2 = arith.constant 0 : index
    %1 = vector.load %arg3[%c0_1, %c0_2] : memref<2x8xf32, #tpu.memory_space<vmem>>, vector<2x8xf32>
    %cst = arith.constant dense<0.000000e+00> : vector<2x256xf32>
    %2 = tpu.matmul %1, %0, %cst {dimension_numbers = #tpu.dot_dimension_numbers<[1], [0], [0], [1], [0, 0, 1, 1], [], []>} : vector<2x8xf32>, vector<8x256xf32>, vector<2x256xf32> -> vector<2x256xf32>
    %cst_3 = arith.constant dense<0xFF800000> : vector<2xf32>
    %3 = vector.multi_reduction <maximumf>, %2, %cst_3 [1] : vector<2x256xf32> to vector<2xf32>
    %4 = vector.shape_cast %3 : vector<2xf32> to vector<2x1xf32>
    %5 = vector.broadcast %4 : vector<2x1xf32> to vector<2x256xf32>
    %6 = arith.subf %2, %5 : vector<2x256xf32>
    %7 = math.exp %6 : vector<2x256xf32>
    %cst_4 = arith.constant dense<0.000000e+00> : vector<2xf32>
    %8 = vector.multi_reduction <add>, %7, %cst_4 [1] : vector<2x256xf32> to vector<2xf32>
    %9 = vector.shape_cast %8 : vector<2xf32> to vector<2x1xf32>
    %10 = tpu.reciprocal %9 : vector<2x1xf32> -> vector<2x1xf32>
    %11 = vector.broadcast %10 : vector<2x1xf32> to vector<2x256xf32>
    %12 = arith.mulf %7, %11 : vector<2x256xf32>
    %c0_5 = arith.constant 0 : index
    %c0_6 = arith.constant 0 : index
    %13 = vector.load %arg11[%c0_5, %c0_6] : memref<2x256xf32, #tpu.memory_space<vmem>>, vector<2x256xf32>
    tpu.vector_store %arg11[%c0_5, %c0_6], %12 {strides = array<i32>} : memref<2x256xf32, #tpu.memory_space<vmem>>, vector<2x256xf32>,
    %cst_7 = arith.constant dense<0.000000e+00> : vector<8xf32>
    %14 = vector.multi_reduction <add>, %0, %cst_7 [1] : vector<8x256xf32> to vector<8xf32>
    %15 = vector.shape_cast %14 : vector<8xf32> to vector<8x1xf32>
    %c0_8 = arith.constant 0 : index
    %c0_9 = arith.constant 0 : index
    %16 = vector.load %arg4[%c0_8, %c0_9] : memref<2x8xf32, #tpu.memory_space<vmem>>, vector<2x8xf32>
    %c0_10 = arith.constant 0 : index
    %c0_11 = arith.constant 0 : index
    %17 = vector.load %arg5[%c0_10, %c0_11] : memref<8x32xf32, #tpu.memory_space<vmem>>, vector<8x32xf32>
    %18 = vector.broadcast %15 : vector<8x1xf32> to vector<8x32xf32>
    %19 = arith.mulf %18, %17 : vector<8x32xf32>
    %cst_12 = arith.constant dense<0.000000e+00> : vector<2x32xf32>
    %20 = tpu.matmul %16, %19, %cst_12 {dimension_numbers = #tpu.dot_dimension_numbers<[1], [0], [0], [1], [0, 0, 1, 1], [], []>} : vector<2x8xf32>, vector<8x32xf32>, vector<2x32xf32> -> vector<2x32xf32>
    %c0_13 = arith.constant 0 : index
    %c0_14 = arith.constant 0 : index
    %21 = vector.load %arg2[%c0_13, %c0_14] : memref<2x128xf32, #tpu.memory_space<vmem>>, vector<2x128xf32>
    %c0_15 = arith.constant 0 : index
    %c0_16 = arith.constant 0 : index
    %22 = vector.load %arg6[%c0_15, %c0_16] : memref<128x32xf32, #tpu.memory_space<vmem>>, vector<128x32xf32>
    %cst_17 = arith.constant dense<0.000000e+00> : vector<2x32xf32>
    %23 = tpu.matmul %21, %22, %cst_17 {dimension_numbers = #tpu.dot_dimension_numbers<[1], [0], [0], [1], [0, 0, 1, 1], [], []>} : vector<2x128xf32>, vector<128x32xf32>, vector<2x32xf32> -> vector<2x32xf32>
    %24 = arith.addf %20, %23 : vector<2x32xf32>
    %c0_18 = arith.constant 0 : index
    %c0_19 = arith.constant 0 : index
    %25 = vector.load %arg7[%c0_18, %c0_19] : memref<1x32xf32, #tpu.memory_space<vmem>>, vector<1x32xf32>
    %26 = vector.broadcast %25 : vector<1x32xf32> to vector<2x32xf32>
    %27 = arith.addf %24, %26 : vector<2x32xf32>
    %cst_20 = arith.constant 0.000000e+00 : f32
    %28 = vector.broadcast %cst_20 : f32 to vector<2x32xf32>
    %29 = arith.maximumf %27, %28 : vector<2x32xf32>
    %c0_21 = arith.constant 0 : index
    %c0_22 = arith.constant 0 : index
    %30 = vector.load %arg8[%c0_21, %c0_22] : memref<32x128xf32, #tpu.memory_space<vmem>>, vector<32x128xf32>
    %cst_23 = arith.constant dense<0.000000e+00> : vector<2x128xf32>
    %31 = tpu.matmul %29, %30, %cst_23 {dimension_numbers = #tpu.dot_dimension_numbers<[1], [0], [0], [1], [0, 0, 1, 1], [], []>} : vector<2x32xf32>, vector<32x128xf32>, vector<2x128xf32> -> vector<2x128xf32>
    %c0_24 = arith.constant 0 : index
    %c0_25 = arith.constant 0 : index
    %32 = vector.load %arg9[%c0_24, %c0_25] : memref<1x128xf32, #tpu.memory_space<vmem>>, vector<1x128xf32>
    %33 = vector.broadcast %32 : vector<1x128xf32> to vector<2x128xf32>
    %34 = arith.addf %31, %33 : vector<2x128xf32>
    %cst_26 = arith.constant dense<0xFF800000> : vector<2xf32>
    %35 = vector.multi_reduction <maximumf>, %34, %cst_26 [1] : vector<2x128xf32> to vector<2xf32>
    %36 = vector.shape_cast %35 : vector<2xf32> to vector<2x1xf32>
    %37 = vector.broadcast %36 : vector<2x1xf32> to vector<2x128xf32>
    %38 = arith.subf %34, %37 : vector<2x128xf32>
    %39 = math.exp %38 : vector<2x128xf32>
    %cst_27 = arith.constant dense<0.000000e+00> : vector<2xf32>
    %40 = vector.multi_reduction <add>, %39, %cst_27 [1] : vector<2x128xf32> to vector<2xf32>
    %41 = vector.shape_cast %40 : vector<2xf32> to vector<2x1xf32>
    %42 = tpu.reciprocal %41 : vector<2x1xf32> -> vector<2x1xf32>
    %43 = vector.broadcast %42 : vector<2x1xf32> to vector<2x128xf32>
    %44 = arith.mulf %39, %43 : vector<2x128xf32>
    %c0_28 = arith.constant 0 : index
    %c0_29 = arith.constant 0 : index
    %45 = vector.load %arg10[%c0_28, %c0_29] : memref<2x128xf32, #tpu.memory_space<vmem>>, vector<2x128xf32>
    tpu.vector_store %arg10[%c0_28, %c0_29], %44 {strides = array<i32>} : memref<2x128xf32, #tpu.memory_space<vmem>>, vector<2x128xf32>,
    return
  }
  func.func @transform_0(%arg0: i32) -> (i32, i32) {
    %c0_i32 = arith.constant 0 : i32
    %c0_i32_0 = arith.constant 0 : i32
    return %arg0, %c0_i32 : i32, i32
  }
  func.func @transform_1(%arg0: i32) -> (i32, i32) {
    %c0_i32 = arith.constant 0 : i32
    %c0_i32_0 = arith.constant 0 : i32
    return %arg0, %c0_i32 : i32, i32
  }
  func.func @transform_2(%arg0: i32) -> (i32, i32) {
    %c0_i32 = arith.constant 0 : i32
    %c0_i32_0 = arith.constant 0 : i32
    %c0_i32_1 = arith.constant 0 : i32
    return %c0_i32, %c0_i32_0 : i32, i32
  }
  func.func @transform_3(%arg0: i32) -> (i32, i32) {
    %c0_i32 = arith.constant 0 : i32
    %c0_i32_0 = arith.constant 0 : i32
    %c0_i32_1 = arith.constant 0 : i32
    return %c0_i32, %c0_i32_0 : i32, i32
  }
  func.func @transform_4(%arg0: i32) -> (i32, i32) {
    %c0_i32 = arith.constant 0 : i32
    %c0_i32_0 = arith.constant 0 : i32
    %c0_i32_1 = arith.constant 0 : i32
    return %c0_i32, %c0_i32_0 : i32, i32
  }
  func.func @transform_5(%arg0: i32) -> (i32, i32) {
    %c0_i32 = arith.constant 0 : i32
    %c0_i32_0 = arith.constant 0 : i32
    %c0_i32_1 = arith.constant 0 : i32
    return %c0_i32, %c0_i32_0 : i32, i32
  }
  func.func @transform_6(%arg0: i32) -> (i32, i32) {
    %c0_i32 = arith.constant 0 : i32
    %c0_i32_0 = arith.constant 0 : i32
    %c0_i32_1 = arith.constant 0 : i32
    return %c0_i32, %c0_i32_0 : i32, i32
  }
  func.func @transform_7(%arg0: i32) -> (i32, i32) {
    %c0_i32 = arith.constant 0 : i32
    %c0_i32_0 = arith.constant 0 : i32
    %c0_i32_1 = arith.constant 0 : i32
    return %c0_i32, %c0_i32_0 : i32, i32
  }
  func.func @transform_8(%arg0: i32) -> (i32, i32) {
    %c0_i32 = arith.constant 0 : i32
    %c0_i32_0 = arith.constant 0 : i32
    %c0_i32_1 = arith.constant 0 : i32
    return %c0_i32, %c0_i32_0 : i32, i32
  }
  func.func @transform_9(%arg0: i32) -> (i32, i32) {
    %c0_i32 = arith.constant 0 : i32
    %c0_i32_0 = arith.constant 0 : i32
    return %arg0, %c0_i32 : i32, i32
  }
  func.func @transform_10(%arg0: i32) -> (i32, i32) {
    %c0_i32 = arith.constant 0 : i32
    %c0_i32_0 = arith.constant 0 : i32
    return %arg0, %c0_i32 : i32, i32
  }
}

module attributes {stable_mosaic.version = 11 : i64} {
  func.func @action_proposal_kernel(%arg0: i32, %arg1: memref<8x256xf32, #tpu.memory_space<vmem>>, %arg2: memref<2x128xf32, #tpu.memory_space<vmem>>, %arg3: memref<2x8xf32, #tpu.memory_space<vmem>>, %arg4: memref<2x8xf32, #tpu.memory_space<vmem>>, %arg5: memref<8x32xf32, #tpu.memory_space<vmem>>, %arg6: memref<128x32xf32, #tpu.memory_space<vmem>>, %arg7: memref<1x32xf32, #tpu.memory_space<vmem>>, %arg8: memref<32x128xf32, #tpu.memory_space<vmem>>, %arg9: memref<1x128xf32, #tpu.memory_space<vmem>>, %arg10: memref<2x128xf32, #tpu.memory_space<vmem>>, %arg11: memref<2x256xf32, #tpu.memory_space<vmem>>) attributes {dimension_semantics = [#tpu.dimension_semantics<parallel>], iteration_bounds = array<i64: 1>, scalar_prefetch = 0 : i64, scratch_operands = 0 : i64, tpu.core_type = #tpu.core_type<tc>, window_params = [{transform_indices = @transform_0, window_bounds = array<i64: 8, 256>}, {transform_indices = @transform_1, window_bounds = array<i64: 2, 128>}, {pipeline_mode = #tpu.pipeline_mode<synchronous>, transform_indices = @transform_2, window_bounds = array<i64: 2, 8>}, {pipeline_mode = #tpu.pipeline_mode<synchronous>, transform_indices = @transform_3, window_bounds = array<i64: 2, 8>}, {pipeline_mode = #tpu.pipeline_mode<synchronous>, transform_indices = @transform_4, window_bounds = array<i64: 8, 32>}, {pipeline_mode = #tpu.pipeline_mode<synchronous>, transform_indices = @transform_5, window_bounds = array<i64: 128, 32>}, {pipeline_mode = #tpu.pipeline_mode<synchronous>, transform_indices = @transform_6, window_bounds = array<i64: 1, 32>}, {pipeline_mode = #tpu.pipeline_mode<synchronous>, transform_indices = @transform_7, window_bounds = array<i64: 32, 128>}, {pipeline_mode = #tpu.pipeline_mode<synchronous>, transform_indices = @transform_8, window_bounds = array<i64: 1, 128>}, {transform_indices = @transform_9, window_bounds = array<i64: 2, 128>}, {transform_indices = @transform_10, window_bounds = array<i64: 2, 256>}]} {
    %c0 = arith.constant 0 : index
    %c0_0 = arith.constant 0 : index
    %0 = vector.load %arg1[%c0, %c0_0] : memref<8x256xf32, #tpu.memory_space<vmem>>, vector<8x256xf32>
    %c0_1 = arith.constant 0 : index
    %c0_2 = arith.constant 0 : index
    %1 = vector.load %arg3[%c0_1, %c0_2] : memref<2x8xf32, #tpu.memory_space<vmem>>, vector<2x8xf32>
    %cst = arith.constant dense<0.000000e+00> : vector<2x256xf32>
    %2 = tpu.matmul %1, %0, %cst {dimension_numbers = #tpu.dot_dimension_numbers<[1], [0], [0], [1], [0, 0, 1, 1], [], []>} : vector<2x8xf32>, vector<8x256xf32>, vector<2x256xf32> -> vector<2x256xf32>
    %cst_3 = arith.constant dense<0xFF800000> : vector<2xf32>
    %3 = vector.multi_reduction <maximumf>, %2, %cst_3 [1] : vector<2x256xf32> to vector<2xf32>
    %4 = vector.shape_cast %3 : vector<2xf32> to vector<2x1xf32>
    %5 = vector.broadcast %4 : vector<2x1xf32> to vector<2x256xf32>
    %6 = arith.subf %2, %5 : vector<2x256xf32>
    %7 = math.exp %6 : vector<2x256xf32>
    %cst_4 = arith.constant dense<0.000000e+00> : vector<2xf32>
    %8 = vector.multi_reduction <add>, %7, %cst_4 [1] : vector<2x256xf32> to vector<2xf32>
    %9 = vector.shape_cast %8 : vector<2xf32> to vector<2x1xf32>
    %10 = tpu.reciprocal %9 : vector<2x1xf32> -> vector<2x1xf32>
    %11 = vector.broadcast %10 : vector<2x1xf32> to vector<2x256xf32>
    %12 = arith.mulf %7, %11 : vector<2x256xf32>
    %c0_5 = arith.constant 0 : index
    %c0_6 = arith.constant 0 : index
    %13 = vector.load %arg11[%c0_5, %c0_6] : memref<2x256xf32, #tpu.memory_space<vmem>>, vector<2x256xf32>
    tpu.vector_store %arg11[%c0_5, %c0_6], %12 {strides = array<i32>} : memref<2x256xf32, #tpu.memory_space<vmem>>, vector<2x256xf32>,
    %cst_7 = arith.constant dense<0.000000e+00> : vector<8xf32>
    %14 = vector.multi_reduction <add>, %0, %cst_7 [1] : vector<8x256xf32> to vector<8xf32>
    %15 = vector.shape_cast %14 : vector<8xf32> to vector<8x1xf32>
    %c0_8 = arith.constant 0 : index
    %c0_9 = arith.constant 0 : index
    %16 = vector.load %arg4[%c0_8, %c0_9] : memref<2x8xf32, #tpu.memory_space<vmem>>, vector<2x8xf32>
    %c0_10 = arith.constant 0 : index
    %c0_11 = arith.constant 0 : index
    %17 = vector.load %arg5[%c0_10, %c0_11] : memref<8x32xf32, #tpu.memory_space<vmem>>, vector<8x32xf32>
    %18 = vector.broadcast %15 : vector<8x1xf32> to vector<8x32xf32>
    %19 = arith.mulf %18, %17 : vector<8x32xf32>
    %cst_12 = arith.constant dense<0.000000e+00> : vector<2x32xf32>
    %20 = tpu.matmul %16, %19, %cst_12 {dimension_numbers = #tpu.dot_dimension_numbers<[1], [0], [0], [1], [0, 0, 1, 1], [], []>} : vector<2x8xf32>, vector<8x32xf32>, vector<2x32xf32> -> vector<2x32xf32>
    %c0_13 = arith.constant 0 : index
    %c0_14 = arith.constant 0 : index
    %21 = vector.load %arg2[%c0_13, %c0_14] : memref<2x128xf32, #tpu.memory_space<vmem>>, vector<2x128xf32>
    %c0_15 = arith.constant 0 : index
    %c0_16 = arith.constant 0 : index
    %22 = vector.load %arg6[%c0_15, %c0_16] : memref<128x32xf32, #tpu.memory_space<vmem>>, vector<128x32xf32>
    %cst_17 = arith.constant dense<0.000000e+00> : vector<2x32xf32>
    %23 = tpu.matmul %21, %22, %cst_17 {dimension_numbers = #tpu.dot_dimension_numbers<[1], [0], [0], [1], [0, 0, 1, 1], [], []>} : vector<2x128xf32>, vector<128x32xf32>, vector<2x32xf32> -> vector<2x32xf32>
    %24 = arith.addf %20, %23 : vector<2x32xf32>
    %c0_18 = arith.constant 0 : index
    %c0_19 = arith.constant 0 : index
    %25 = vector.load %arg7[%c0_18, %c0_19] : memref<1x32xf32, #tpu.memory_space<vmem>>, vector<1x32xf32>
    %26 = vector.broadcast %25 : vector<1x32xf32> to vector<2x32xf32>
    %27 = arith.addf %24, %26 : vector<2x32xf32>
    %cst_20 = arith.constant 0.000000e+00 : f32
    %28 = vector.broadcast %cst_20 : f32 to vector<2x32xf32>
    %29 = arith.maximumf %27, %28 : vector<2x32xf32>
    %c0_21 = arith.constant 0 : index
    %c0_22 = arith.constant 0 : index
    %30 = vector.load %arg8[%c0_21, %c0_22] : memref<32x128xf32, #tpu.memory_space<vmem>>, vector<32x128xf32>
    %cst_23 = arith.constant dense<0.000000e+00> : vector<2x128xf32>
    %31 = tpu.matmul %29, %30, %cst_23 {dimension_numbers = #tpu.dot_dimension_numbers<[1], [0], [0], [1], [0, 0, 1, 1], [], []>} : vector<2x32xf32>, vector<32x128xf32>, vector<2x128xf32> -> vector<2x128xf32>
    %c0_24 = arith.constant 0 : index
    %c0_25 = arith.constant 0 : index
    %32 = vector.load %arg9[%c0_24, %c0_25] : memref<1x128xf32, #tpu.memory_space<vmem>>, vector<1x128xf32>
    %33 = vector.broadcast %32 : vector<1x128xf32> to vector<2x128xf32>
    %34 = arith.addf %31, %33 : vector<2x128xf32>
    %cst_26 = arith.constant dense<0xFF800000> : vector<2xf32>
    %35 = vector.multi_reduction <maximumf>, %34, %cst_26 [1] : vector<2x128xf32> to vector<2xf32>
    %36 = vector.shape_cast %35 : vector<2xf32> to vector<2x1xf32>
    %37 = vector.broadcast %36 : vector<2x1xf32> to vector<2x128xf32>
    %38 = arith.subf %34, %37 : vector<2x128xf32>
    %39 = math.exp %38 : vector<2x128xf32>
    %cst_27 = arith.constant dense<0.000000e+00> : vector<2xf32>
    %40 = vector.multi_reduction <add>, %39, %cst_27 [1] : vector<2x128xf32> to vector<2xf32>
    %41 = vector.shape_cast %40 : vector<2xf32> to vector<2x1xf32>
    %42 = tpu.reciprocal %41 : vector<2x1xf32> -> vector<2x1xf32>
    %43 = vector.broadcast %42 : vector<2x1xf32> to vector<2x128xf32>
    %44 = arith.mulf %39, %43 : vector<2x128xf32>
    %c0_28 = arith.constant 0 : index
    %c0_29 = arith.constant 0 : index
    %45 = vector.load %arg10[%c0_28, %c0_29] : memref<2x128xf32, #tpu.memory_space<vmem>>, vector<2x128xf32>
    tpu.vector_store %arg10[%c0_28, %c0_29], %44 {strides = array<i32>} : memref<2x128xf32, #tpu.memory_space<vmem>>, vector<2x128xf32>,
    return
  }
  func.func @transform_0(%arg0: i32) -> (i32, i32) {
    %c0_i32 = arith.constant 0 : i32
    %c0_i32_0 = arith.constant 0 : i32
    return %arg0, %c0_i32 : i32, i32
  }
  func.func @transform_1(%arg0: i32) -> (i32, i32) {
    %c0_i32 = arith.constant 0 : i32
    %c0_i32_0 = arith.constant 0 : i32
    return %arg0, %c0_i32 : i32, i32
  }
  func.func @transform_2(%arg0: i32) -> (i32, i32) {
    %c0_i32 = arith.constant 0 : i32
    %c0_i32_0 = arith.constant 0 : i32
    %c0_i32_1 = arith.constant 0 : i32
    return %c0_i32, %c0_i32_0 : i32, i32
  }
  func.func @transform_3(%arg0: i32) -> (i32, i32) {
    %c0_i32 = arith.constant 0 : i32
    %c0_i32_0 = arith.constant 0 : i32
    %c0_i32_1 = arith.constant 0 : i32
    return %c0_i32, %c0_i32_0 : i32, i32
  }
  func.func @transform_4(%arg0: i32) -> (i32, i32) {
    %c0_i32 = arith.constant 0 : i32
    %c0_i32_0 = arith.constant 0 : i32
    %c0_i32_1 = arith.constant 0 : i32
    return %c0_i32, %c0_i32_0 : i32, i32
  }
  func.func @transform_5(%arg0: i32) -> (i32, i32) {
    %c0_i32 = arith.constant 0 : i32
    %c0_i32_0 = arith.constant 0 : i32
    %c0_i32_1 = arith.constant 0 : i32
    return %c0_i32, %c0_i32_0 : i32, i32
  }
  func.func @transform_6(%arg0: i32) -> (i32, i32) {
    %c0_i32 = arith.constant 0 : i32
    %c0_i32_0 = arith.constant 0 : i32
    %c0_i32_1 = arith.constant 0 : i32
    return %c0_i32, %c0_i32_0 : i32, i32
  }
  func.func @transform_7(%arg0: i32) -> (i32, i32) {
    %c0_i32 = arith.constant 0 : i32
    %c0_i32_0 = arith.constant 0 : i32
    %c0_i32_1 = arith.constant 0 : i32
    return %c0_i32, %c0_i32_0 : i32, i32
  }
  func.func @transform_8(%arg0: i32) -> (i32, i32) {
    %c0_i32 = arith.constant 0 : i32
    %c0_i32_0 = arith.constant 0 : i32
    %c0_i32_1 = arith.constant 0 : i32
    return %c0_i32, %c0_i32_0 : i32, i32
  }
  func.func @transform_9(%arg0: i32) -> (i32, i32) {
    %c0_i32 = arith.constant 0 : i32
    %c0_i32_0 = arith.constant 0 : i32
    return %arg0, %c0_i32 : i32, i32
  }
  func.func @transform_10(%arg0: i32) -> (i32, i32) {
    %c0_i32 = arith.constant 0 : i32
    %c0_i32_0 = arith.constant 0 : i32
    return %arg0, %c0_i32 : i32, i32
  }
}

</mosaic_0001>

<llo_original>
// kernel: tpu_custom_call.1
$region0: #{tpu_custom_call.1}
  #allocation0 [shape = 'u32[]', space=smem, size = 0x4, offset = 0x4, fixed_abs, tag = 'smem constant byte address 0x4 - core index']
  #allocation1 [shape = 'u32[144,128]{1,0:T(1,128)}', space=vmem, size = 0x12000, scoped, tag = 'internal scratch']
  %s0 = inlined_call_operand.vmem [shape: f32[8,256], index: 0, kind: input, shape index: {}]
  %s1 = inlined_call_operand.vmem [shape: f32[2,128], index: 1, kind: input, shape index: {}]
  %s2 = inlined_call_operand.vmem [shape: f32[2,8], index: 2, kind: input, shape index: {}]
  %s3 = inlined_call_operand.vmem [shape: f32[2,8], index: 3, kind: input, shape index: {}]
  %s4 = inlined_call_operand.vmem [shape: f32[8,32], index: 4, kind: input, shape index: {}]
  %s5 = inlined_call_operand.vmem [shape: f32[128,32], index: 5, kind: input, shape index: {}]
  %s6 = inlined_call_operand.vmem [shape: f32[1,32], index: 6, kind: input, shape index: {}]
  %s7 = inlined_call_operand.vmem [shape: f32[32,128], index: 7, kind: input, shape index: {}]
  %s8 = inlined_call_operand.vmem [shape: f32[1,128], index: 8, kind: input, shape index: {}]
  %s9 = inlined_call_operand.hbm [shape: f32[2,128], index: 9, kind: output, shape index: {0}]
  %s10 = inlined_call_operand.hbm [shape: f32[2,256], index: 10, kind: output, shape index: {1}]
  %11 = xla_tuple %s9, %s10
  %s12 = sld [smem:[#allocation0]]
  $region54: #{tpu_custom_call.1} parent=0
    _
  %s14 = ssub.s32 1, %s12
  %s15 = scalar_select 0, %s14, %s12
  $region1: #{tpu_custom_call.1} parent=0
    #allocation2 [shape = 'u8[1024]{0}', space=vmem, size = 0x400, scoped, tag = 'output window, operand 0, single buffered']
    #allocation3 [shape = 's32[1]{0}', space=sflag, size = 0x4, scoped, tag = 'scoped memory for tpu_custom_call.1']
    #allocation4 [shape = 'u8[2048]{0}', space=vmem, size = 0x800, scoped, tag = 'output window, operand 1, single buffered']
    #allocation5 [shape = 's32[1]{0}', space=sflag, size = 0x4, scoped, tag = 'scoped memory for tpu_custom_call.1']
    %16 = vsyncpa [#allocation3], 0
    %17 = vsyncpa [#allocation5], 0
    // Predicated region
    $region2: #{tpu_custom_call.1} parent=1 // pred_check
      _
    $region3: #{tpu_custom_call.1} parent=1 // pred_check_branch
      %19 = sbr.rel (0) target = $region5
    $region4: #{tpu_custom_call.1} parent=1 // pred_region
      _
    $region5: #{tpu_custom_call.1} parent=1 // pred_fallthru
      _
    // Predicated region
    $region6: #{tpu_custom_call.1} parent=1 // pred_check
      _
    $region7: #{tpu_custom_call.1} parent=1 // pred_check_branch
      %21 = sbr.rel (0) target = $region9
    $region8: #{tpu_custom_call.1} parent=1 // pred_region
      _
    $region9: #{tpu_custom_call.1} parent=1 // pred_fallthru
      _
    // Predicated region
    $region10: #{tpu_custom_call.1} parent=1 // pred_check
      _
    $region11: #{tpu_custom_call.1} parent=1 // pred_check_branch
      %23 = sbr.rel (0) target = $region13
    $region12: #{tpu_custom_call.1} parent=1 // pred_region
      _
    $region13: #{tpu_custom_call.1} parent=1 // pred_fallthru
      _
    // Predicated region
    $region14: #{tpu_custom_call.1} parent=1 // pred_check
      _
    $region15: #{tpu_custom_call.1} parent=1 // pred_check_branch
      %25 = sbr.rel (0) target = $region17
    $region16: #{tpu_custom_call.1} parent=1 // pred_region
      _
    $region17: #{tpu_custom_call.1} parent=1 // pred_fallthru
      _
    // Predicated region
    $region18: #{tpu_custom_call.1} parent=1 // pred_check
      _
    $region19: #{tpu_custom_call.1} parent=1 // pred_check_branch
      %27 = sbr.rel (0) target = $region21
    $region20: #{tpu_custom_call.1} parent=1 // pred_region
      _
    $region21: #{tpu_custom_call.1} parent=1 // pred_fallthru
      _
    // Predicated region
    $region22: #{tpu_custom_call.1} parent=1 // pred_check
      _
    $region23: #{tpu_custom_call.1} parent=1 // pred_check_branch
      %29 = sbr.rel (0) target = $region25
    $region24: #{tpu_custom_call.1} parent=1 // pred_region
      _
    $region25: #{tpu_custom_call.1} parent=1 // pred_fallthru
      _
    // Predicated region
    $region26: #{tpu_custom_call.1} parent=1 // pred_check
      _
    $region27: #{tpu_custom_call.1} parent=1 // pred_check_branch
      %31 = sbr.rel (0) target = $region29
    $region28: #{tpu_custom_call.1} parent=1 // pred_region
      _
    $region29: #{tpu_custom_call.1} parent=1 // pred_fallthru
      _
    // Predicated region
    $region30: #{tpu_custom_call.1} parent=1 // pred_check
      _
    $region31: #{tpu_custom_call.1} parent=1 // pred_check_branch
      %33 = sbr.rel (0) target = $region33
    $region32: #{tpu_custom_call.1} parent=1 // pred_region
      _
    $region33: #{tpu_custom_call.1} parent=1 // pred_fallthru
      _
    // Predicated region
    $region34: #{tpu_custom_call.1} parent=1 // pred_check
      _
    $region35: #{tpu_custom_call.1} parent=1 // pred_check_branch
      %35 = sbr.rel (0) target = $region37
    $region36: #{tpu_custom_call.1} parent=1 // pred_region
      _
    $region37: #{tpu_custom_call.1} parent=1 // pred_fallthru
      _
    %v36 = vld [vmem:[%s0] sm:$0xff]
    %v37 = vld [vmem:[%s0 + $0x8] sm:$0xff]
    %v38 = vld [vmem:[%s2] sm:$0x3]
    %vm39 = vcmask 64512
    %v41 = vsel %vm39, %v38, 0
    %43 = vmatprep.subr.mxu0 %v37
    %44 = vmatpush1.msra.mxu0 %v36
    %45 = vmatprep.subr.mxu0 0.0
    %46 = vmatpush1.msra.mxu0 0.0
    %47 = vmatprep.subr.mxu0 0.0
    %48 = vmatpush1.msra.mxu0 0.0
    %49 = vmatprep.subr.mxu0 0.0
    %50 = vmatpush1.msra.mxu0 0.0
    %51 = vmatprep.subr.mxu0 0.0
    %52 = vmatpush1.msra.mxu0 0.0
    %53 = vmatprep.subr.mxu0 0.0
    %54 = vmatpush1.msra.mxu0 0.0
    %55 = vmatprep.subr.mxu0 0.0
    %56 = vmatpush1.msra.mxu0 0.0
    %57 = vmatprep.subr.mxu0 0.0
    %58 = vmatpush1.msra.mxu0 0.0
    %59 = vmatprep.subr.mxu0 0.0
    %60 = vmatpush1.msra.mxu0 0.0
    %61 = vmatprep.subr.mxu0 0.0
    %62 = vmatpush1.msra.mxu0 0.0
    %63 = vmatprep.subr.mxu0 0.0
    %64 = vmatpush1.msra.mxu0 0.0
    %65 = vmatprep.subr.mxu0 0.0
    %66 = vmatpush1.msra.mxu0 0.0
    %67 = vmatprep.subr.mxu0 0.0
    %68 = vmatpush1.msra.mxu0 0.0
    %69 = vmatprep.subr.mxu0 0.0
    %70 = vmatpush1.msra.mxu0 0.0
    %71 = vmatprep.subr.mxu0 0.0
    %72 = vmatpush1.msra.mxu0 0.0
    %73 = vmatprep.subr.mxu0 0.0
    %74 = vmatpush1.msra.mxu0 0.0
    %75 = vmatprep.subr.mxu0 0.0
    %76 = vmatpush1.msra.mxu0 0.0
    %77 = vmatprep.subr.mxu0 0.0
    %78 = vmatpush1.msra.mxu0 0.0
    %79 = vmatprep.subr.mxu0 0.0
    %80 = vmatpush1.msra.mxu0 0.0
    %81 = vmatprep.subr.mxu0 0.0
    %82 = vmatpush1.msra.mxu0 0.0
    %83 = vmatprep.subr.mxu0 0.0
    %84 = vmatpush1.msra.mxu0 0.0
    %85 = vmatprep.subr.mxu0 0.0
    %86 = vmatpush1.msra.mxu0 0.0
    %87 = vmatprep.subr.mxu0 0.0
    %88 = vmatpush1.msra.mxu0 0.0
    %89 = vmatprep.subr.mxu0 0.0
    %90 = vmatpush1.msra.mxu0 0.0
    %91 = vmatprep.subr.mxu0 0.0
    %92 = vmatpush1.msra.mxu0 0.0
    %93 = vmatprep.subr.mxu0 0.0
    %94 = vmatpush1.msra.mxu0 0.0
    %95 = vmatprep.subr.mxu0 0.0
    %96 = vmatpush1.msra.mxu0 0.0
    %97 = vmatprep.subr.mxu0 0.0
    %98 = vmatpush1.msra.mxu0 0.0
    %99 = vmatprep.subr.mxu0 0.0
    %100 = vmatpush1.msra.mxu0 0.0
    %101 = vmatprep.subr.mxu0 0.0
    %102 = vmatpush1.msra.mxu0 0.0
    %103 = vmatprep.subr.mxu0 0.0
    %104 = vmatpush1.msra.mxu0 0.0
    %105 = vmatprep.subr.mxu0 0.0
    %106 = vmatpush1.msra.mxu0 0.0
    %107 = vmatprep.mubr.f32.mxu0 0.0
    %108 = vmatmul.mubr.f32.gmra.mrb[0].mxu0 %v41
    %v109 = vpop.f32.mrb[0].mxu0
    %v110 = vadd.f32 0.0, %v109
    %v111 = vpop.f32.mrb[0].mxu0
    %v112 = vadd.f32 0.0, %v111
    %113 = vdwg.mxu0
    %vm114 = vcmask 1041408
    %v115 = vsel %vm114, %v110, -inf
    %v116 = vsel %vm114, %v112, -inf
    %v117 = vmax.f32 %v115, %v116
    %118 = vmax.xlane.f32.xlu0 %v117
    %v119 = vpop.xlane.xlu0 %118
    %v120 = vsub.f32 %v110, %v119
    %v121 = vsub.f32 %v112, %v119
    %v122 = vmul.f32 %v120, 1.442695
    %v123 = vpow.pop %v122
    %v124 = vmul.f32 %v121, 1.442695
    %v125 = vpow.pop %v124
    %v126 = vsel %vm114, %v123, 0.0
    %v127 = vsel %vm114, %v125, 0.0
    %v128 = vadd.f32 %v126, %v127
    %129 = vadd.xlane.f32.xlu0 %v128
    %v130 = vpop.xlane.xlu0 %129
    %v131 = vrcp.pop %v130
    %v132 = vmul.f32 %v123, %v131
    %v133 = vmul.f32 %v125, %v131
    %v136 = vcombine.low %v132, %v133
    %v138 = vunpack.c.l.s4 1983009808
    %v139 = vunpack.c.0.s8 %v138
    %v140 = vlaneseq
    %v141 = vshrl.u32 %v140, 7
    %v142 = vsub.s32 %v139, %v141
    %v143 = vrot.slane %v136, %v142
    %145 = vst [vmem:[#allocation4] sm:$0xf] %v143
    %v146 = vadd.f32 %v36, %v37
    %147 = vadd.xlane.f32.xlu0 %v146
    %v148 = vpop.xlane.xlu0 %147
    %v149 = vld [vmem:[%s3] sm:$0x3]
    %v150 = vld [vmem:[%s4] sm:$0xff]
    %v151 = vmul.f32 %v148, %v150
    %v152 = vld [vmem:[%s1] sm:$0x3]
    %v153 = vld [vmem:[%s5] sm:$0xff]
    %v154 = vld [vmem:[%s5 + $0x8] sm:$0xff]
    %v155 = vld [vmem:[%s5 + $0x10] sm:$0xff]
    %v156 = vld [vmem:[%s5 + $0x18] sm:$0xff]
    %v157 = vld [vmem:[%s5 + $0x20] sm:$0xff]
    %v158 = vld [vmem:[%s5 + $0x28] sm:$0xff]
    %v159 = vld [vmem:[%s5 + $0x30] sm:$0xff]
    %v160 = vld [vmem:[%s5 + $0x38] sm:$0xff]
    %v161 = vld [vmem:[%s5 + $0x40] sm:$0xff]
    %v162 = vld [vmem:[%s5 + $0x48] sm:$0xff]
    %v163 = vld [vmem:[%s5 + $0x50] sm:$0xff]
    %v164 = vld [vmem:[%s5 + $0x58] sm:$0xff]
    %v165 = vld [vmem:[%s5 + $0x60] sm:$0xff]
    %v166 = vld [vmem:[%s5 + $0x68] sm:$0xff]
    %v167 = vld [vmem:[%s5 + $0x70] sm:$0xff]
    %v168 = vld [vmem:[%s5 + $0x78] sm:$0xff]
    %169 = vmatprep.subr.mxu0 0.0
    %170 = vmatpush1.msra.mxu0 %v153
    %171 = vmatprep.subr.mxu0 0.0
    %172 = vmatpush1.msra.mxu0 %v154
    %173 = vmatprep.subr.mxu0 0.0
    %174 = vmatpush1.msra.mxu0 %v155
    %175 = vmatprep.subr.mxu0 0.0
    %176 = vmatpush1.msra.mxu0 %v156
    %177 = vmatprep.subr.mxu0 0.0
    %178 = vmatpush1.msra.mxu0 %v157
    %179 = vmatprep.subr.mxu0 0.0
    %180 = vmatpush1.msra.mxu0 %v158
    %181 = vmatprep.subr.mxu0 0.0
    %182 = vmatpush1.msra.mxu0 %v159
    %183 = vmatprep.subr.mxu0 0.0
    %184 = vmatpush1.msra.mxu0 %v160
    %185 = vmatprep.subr.mxu0 0.0
    %186 = vmatpush1.msra.mxu0 %v161
    %187 = vmatprep.subr.mxu0 0.0
    %188 = vmatpush1.msra.mxu0 %v162
    %189 = vmatprep.subr.mxu0 0.0
    %190 = vmatpush1.msra.mxu0 %v163
    %191 = vmatprep.subr.mxu0 0.0
    %192 = vmatpush1.msra.mxu0 %v164
    %193 = vmatprep.subr.mxu0 0.0
    %194 = vmatpush1.msra.mxu0 %v165
    %195 = vmatprep.subr.mxu0 0.0
    %196 = vmatpush1.msra.mxu0 %v166
    %197 = vmatprep.subr.mxu0 0.0
    %198 = vmatpush1.msra.mxu0 %v167
    %199 = vmatprep.subr.mxu0 0.0
    %200 = vmatpush1.msra.mxu0 %v168
    %201 = vmatprep.subr.mxu0 0.0
    %202 = vmatpush1.msra.mxu0 0.0
    %203 = vmatprep.subr.mxu0 0.0
    %204 = vmatpush1.msra.mxu0 0.0
    %205 = vmatprep.subr.mxu0 0.0
    %206 = vmatpush1.msra.mxu0 0.0
    %207 = vmatprep.subr.mxu0 0.0
    %208 = vmatpush1.msra.mxu0 0.0
    %209 = vmatprep.subr.mxu0 0.0
    %210 = vmatpush1.msra.mxu0 0.0
    %211 = vmatprep.subr.mxu0 0.0
    %212 = vmatpush1.msra.mxu0 0.0
    %213 = vmatprep.subr.mxu0 0.0
    %214 = vmatpush1.msra.mxu0 0.0
    %215 = vmatprep.subr.mxu0 0.0
    %216 = vmatpush1.msra.mxu0 0.0
    %217 = vmatprep.subr.mxu0 0.0
    %218 = vmatpush1.msra.mxu0 0.0
    %219 = vmatprep.subr.mxu0 0.0
    %220 = vmatpush1.msra.mxu0 0.0
    %221 = vmatprep.subr.mxu0 0.0
    %222 = vmatpush1.msra.mxu0 0.0
    %223 = vmatprep.subr.mxu0 0.0
    %224 = vmatpush1.msra.mxu0 0.0
    %225 = vmatprep.subr.mxu0 0.0
    %226 = vmatpush1.msra.mxu0 0.0
    %227 = vmatprep.subr.mxu0 0.0
    %228 = vmatpush1.msra.mxu0 0.0
    %229 = vmatprep.subr.mxu0 0.0
    %230 = vmatpush1.msra.mxu0 0.0
    %231 = vmatprep.subr.mxu0 0.0
    %232 = vmatpush1.msra.mxu0 0.0
    %233 = vmatprep.mubr.f32.mxu0 0.0
    %234 = vmatmul.mubr.f32.gmra.mrb[0].mxu0 %v152
    %v235 = vpop.f32.mrb[0].mxu0
    %v236 = vadd.f32 0.0, %v235
    %v237 = vpop.f32.mrb[0].mxu0
    %238 = vdwg.mxu0
    %v240 = vsel %vm39, %v149, 0
    %242 = vmatprep.subr.mxu0 0.0
    %243 = vmatpush1.msra.mxu0 %v151
    %244 = vmatprep.subr.mxu0 0.0
    %245 = vmatpush1.msra.mxu0 0.0
    %246 = vmatprep.subr.mxu0 0.0
    %247 = vmatpush1.msra.mxu0 0.0
    %248 = vmatprep.subr.mxu0 0.0
    %249 = vmatpush1.msra.mxu0 0.0
    %250 = vmatprep.subr.mxu0 0.0
    %251 = vmatpush1.msra.mxu0 0.0
    %252 = vmatprep.subr.mxu0 0.0
    %253 = vmatpush1.msra.mxu0 0.0
    %254 = vmatprep.subr.mxu0 0.0
    %255 = vmatpush1.msra.mxu0 0.0
    %256 = vmatprep.subr.mxu0 0.0
    %257 = vmatpush1.msra.mxu0 0.0
    %258 = vmatprep.subr.mxu0 0.0
    %259 = vmatpush1.msra.mxu0 0.0
    %260 = vmatprep.subr.mxu0 0.0
    %261 = vmatpush1.msra.mxu0 0.0
    %262 = vmatprep.subr.mxu0 0.0
    %263 = vmatpush1.msra.mxu0 0.0
    %264 = vmatprep.subr.mxu0 0.0
    %265 = vmatpush1.msra.mxu0 0.0
    %266 = vmatprep.subr.mxu0 0.0
    %267 = vmatpush1.msra.mxu0 0.0
    %268 = vmatprep.subr.mxu0 0.0
    %269 = vmatpush1.msra.mxu0 0.0
    %270 = vmatprep.subr.mxu0 0.0
    %271 = vmatpush1.msra.mxu0 0.0
    %272 = vmatprep.subr.mxu0 0.0
    %273 = vmatpush1.msra.mxu0 0.0
    %274 = vmatprep.subr.mxu0 0.0
    %275 = vmatpush1.msra.mxu0 0.0
    %276 = vmatprep.subr.mxu0 0.0
    %277 = vmatpush1.msra.mxu0 0.0
    %278 = vmatprep.subr.mxu0 0.0
    %279 = vmatpush1.msra.mxu0 0.0
    %280 = vmatprep.subr.mxu0 0.0
    %281 = vmatpush1.msra.mxu0 0.0
    %282 = vmatprep.subr.mxu0 0.0
    %283 = vmatpush1.msra.mxu0 0.0
    %284 = vmatprep.subr.mxu0 0.0
    %285 = vmatpush1.msra.mxu0 0.0
    %286 = vmatprep.subr.mxu0 0.0
    %287 = vmatpush1.msra.mxu0 0.0
    %288 = vmatprep.subr.mxu0 0.0
    %289 = vmatpush1.msra.mxu0 0.0
    %290 = vmatprep.subr.mxu0 0.0
    %291 = vmatpush1.msra.mxu0 0.0
    %292 = vmatprep.subr.mxu0 0.0
    %293 = vmatpush1.msra.mxu0 0.0
    %294 = vmatprep.subr.mxu0 0.0
    %295 = vmatpush1.msra.mxu0 0.0
    %296 = vmatprep.subr.mxu0 0.0
    %297 = vmatpush1.msra.mxu0 0.0
    %298 = vmatprep.subr.mxu0 0.0
    %299 = vmatpush1.msra.mxu0 0.0
    %300 = vmatprep.subr.mxu0 0.0
    %301 = vmatpush1.msra.mxu0 0.0
    %302 = vmatprep.subr.mxu0 0.0
    %303 = vmatpush1.msra.mxu0 0.0
    %304 = vmatprep.subr.mxu0 0.0
    %305 = vmatpush1.msra.mxu0 0.0
    %306 = vmatprep.mubr.f32.mxu0 0.0
    %307 = vmatmul.mubr.f32.gmra.mrb[0].mxu0 %v240
    %v308 = vpop.f32.mrb[0].mxu0
    %v309 = vadd.f32 %v236, %v308
    %v310 = vpop.f32.mrb[0].mxu0
    %311 = vdwg.mxu0
    %v312 = vld [vmem:[%s6] sm:$0x1]
    %v314 = vlaneseq
    %v315 = vshrl.u32 %v314, 7
    %v316 = vsub.s32 0, %v315
    %v317 = vrot.slane %v312, %v316
    %v319 = vadd.f32 %v309, %v317
    %v320 = vmax.f32 %v319, 0.0
    %v321 = vld [vmem:[%s7] sm:$0xff]
    %v322 = vld [vmem:[%s7 + $0x8] sm:$0xff]
    %v323 = vld [vmem:[%s7 + $0x10] sm:$0xff]
    %v324 = vld [vmem:[%s7 + $0x18] sm:$0xff]
    %v325 = vld [vmem:[%s8] sm:$0x1]
    %v327 = vlaneseq
    %v328 = vshrl.u32 %v327, 7
    %v329 = vsub.s32 0, %v328
    %v330 = vrot.slane %v325, %v329
    %vm332 = vcmask 261120
    %v334 = vsel %vm332, %v320, 0
    %336 = vmatprep.subr.mxu0 0.0
    %337 = vmatpush1.msra.mxu0 %v321
    %338 = vmatprep.subr.mxu0 0.0
    %339 = vmatpush1.msra.mxu0 %v322
    %340 = vmatprep.subr.mxu0 0.0
    %341 = vmatpush1.msra.mxu0 %v323
    %342 = vmatprep.subr.mxu0 0.0
    %343 = vmatpush1.msra.mxu0 %v324
    %344 = vmatprep.subr.mxu0 0.0
    %345 = vmatpush1.msra.mxu0 0.0
    %346 = vmatprep.subr.mxu0 0.0
    %347 = vmatpush1.msra.mxu0 0.0
    %348 = vmatprep.subr.mxu0 0.0
    %349 = vmatpush1.msra.mxu0 0.0
    %350 = vmatprep.subr.mxu0 0.0
    %351 = vmatpush1.msra.mxu0 0.0
    %352 = vmatprep.subr.mxu0 0.0
    %353 = vmatpush1.msra.mxu0 0.0
    %354 = vmatprep.subr.mxu0 0.0
    %355 = vmatpush1.msra.mxu0 0.0
    %356 = vmatprep.subr.mxu0 0.0
    %357 = vmatpush1.msra.mxu0 0.0
    %358 = vmatprep.subr.mxu0 0.0
    %359 = vmatpush1.msra.mxu0 0.0
    %360 = vmatprep.subr.mxu0 0.0
    %361 = vmatpush1.msra.mxu0 0.0
    %362 = vmatprep.subr.mxu0 0.0
    %363 = vmatpush1.msra.mxu0 0.0
    %364 = vmatprep.subr.mxu0 0.0
    %365 = vmatpush1.msra.mxu0 0.0
    %366 = vmatprep.subr.mxu0 0.0
    %367 = vmatpush1.msra.mxu0 0.0
    %368 = vmatprep.subr.mxu0 0.0
    %369 = vmatpush1.msra.mxu0 0.0
    %370 = vmatprep.subr.mxu0 0.0
    %371 = vmatpush1.msra.mxu0 0.0
    %372 = vmatprep.subr.mxu0 0.0
    %373 = vmatpush1.msra.mxu0 0.0
    %374 = vmatprep.subr.mxu0 0.0
    %375 = vmatpush1.msra.mxu0 0.0
    %376 = vmatprep.subr.mxu0 0.0
    %377 = vmatpush1.msra.mxu0 0.0
    %378 = vmatprep.subr.mxu0 0.0
    %379 = vmatpush1.msra.mxu0 0.0
    %380 = vmatprep.subr.mxu0 0.0
    %381 = vmatpush1.msra.mxu0 0.0
    %382 = vmatprep.subr.mxu0 0.0
    %383 = vmatpush1.msra.mxu0 0.0
    %384 = vmatprep.subr.mxu0 0.0
    %385 = vmatpush1.msra.mxu0 0.0
    %386 = vmatprep.subr.mxu0 0.0
    %387 = vmatpush1.msra.mxu0 0.0
    %388 = vmatprep.subr.mxu0 0.0
    %389 = vmatpush1.msra.mxu0 0.0
    %390 = vmatprep.subr.mxu0 0.0
    %391 = vmatpush1.msra.mxu0 0.0
    %392 = vmatprep.subr.mxu0 0.0
    %393 = vmatpush1.msra.mxu0 0.0
    %394 = vmatprep.subr.mxu0 0.0
    %395 = vmatpush1.msra.mxu0 0.0
    %396 = vmatprep.subr.mxu0 0.0
    %397 = vmatpush1.msra.mxu0 0.0
    %398 = vmatprep.subr.mxu0 0.0
    %399 = vmatpush1.msra.mxu0 0.0
    %400 = vmatprep.mubr.f32.mxu0 0.0
    %401 = vmatmul.mubr.f32.gmra.mrb[0].mxu0 %v334
    %v402 = vpop.f32.mrb[0].mxu0
    %v403 = vadd.f32 %v330, %v402
    %v404 = vpop.f32.mrb[0].mxu0
    %405 = vdwg.mxu0
    %v406 = vsel %vm114, %v403, -inf
    %407 = vmax.xlane.f32.xlu0 %v406
    %v408 = vpop.xlane.xlu0 %407
    %v409 = vsub.f32 %v403, %v408
    %v410 = vmul.f32 %v409, 1.442695
    %v411 = vpow.pop %v410
    %v412 = vsel %vm114, %v411, 0.0
    %413 = vadd.xlane.f32.xlu0 %v412
    %v414 = vpop.xlane.xlu0 %413
    %v415 = vrcp.pop %v414
    %v416 = vmul.f32 %v411, %v415
    %417 = vst [vmem:[#allocation2] sm:$0x3] %v416
    // Predicated region
    $region38: #{tpu_custom_call.1} parent=1 // pred_check
      _
    $region39: #{tpu_custom_call.1} parent=1 // pred_check_branch
      %419 = sbr.rel (0) target = $region41
    $region40: #{tpu_custom_call.1} parent=1 // pred_region
      %s421 = ssub.s32 32, 32
      %422 = vsyncadd [#allocation3], %s421
      %s424 = sshll.u32 [#allocation2], 4
      %s425 = int_to_ptr.vmem [resolvable:$true] %s424
      %427 = dma.vmem_to_hbm [thread:$0]  %s425, 32, %s9, [#allocation3]
    $region41: #{tpu_custom_call.1} parent=1 // pred_fallthru
      _
    // Predicated region
    $region42: #{tpu_custom_call.1} parent=1 // pred_check
      _
    $region43: #{tpu_custom_call.1} parent=1 // pred_check_branch
      %429 = sbr.rel (0) target = $region45
    $region44: #{tpu_custom_call.1} parent=1 // pred_region
      %s431 = ssub.s32 64, 64
      %432 = vsyncadd [#allocation5], %s431
      %s434 = sshll.u32 [#allocation4], 4
      %s435 = int_to_ptr.vmem [resolvable:$true] %s434
      %437 = dma.vmem_to_hbm [thread:$0]  %s435, 64, %s10, [#allocation5]
    $region45: #{tpu_custom_call.1} parent=1 // pred_fallthru
      _
    // Predicated region
    $region46: #{tpu_custom_call.1} parent=1 // pred_check
      _
    $region47: #{tpu_custom_call.1} parent=1 // pred_check_branch
      %439 = sbr.rel (0) target = $region49
    $region48: #{tpu_custom_call.1} parent=1 // pred_region
      %440 = dma.done [#allocation3], 32
    $region49: #{tpu_custom_call.1} parent=1 // pred_fallthru
      _
    // Predicated region
    $region50: #{tpu_custom_call.1} parent=1 // pred_check
      _
    $region51: #{tpu_custom_call.1} parent=1 // pred_check_branch
      %442 = sbr.rel (0) target = $region53
    $region52: #{tpu_custom_call.1} parent=1 // pred_region
      %443 = dma.done [#allocation5], 64
    $region53: #{tpu_custom_call.1} parent=1 // pred_fallthru
      _
    %444 = vsyncpa [#allocation3], 1
    %445 = vsyncpa [#allocation5], 1

// kernel: tpu_custom_call.1
$region0: #{tpu_custom_call.1}
  #allocation0 [shape = 'u32[]', space=smem, size = 0x4, offset = 0x4, fixed_abs, tag = 'smem constant byte address 0x4 - core index']
  #allocation1 [shape = 'u32[144,128]{1,0:T(1,128)}', space=vmem, size = 0x12000, scoped, tag = 'internal scratch']
  %s0 = inlined_call_operand.vmem [shape: f32[8,256], index: 0, kind: input, shape index: {}]
  %s1 = inlined_call_operand.vmem [shape: f32[2,128], index: 1, kind: input, shape index: {}]
  %s2 = inlined_call_operand.vmem [shape: f32[2,8], index: 2, kind: input, shape index: {}]
  %s3 = inlined_call_operand.vmem [shape: f32[2,8], index: 3, kind: input, shape index: {}]
  %s4 = inlined_call_operand.vmem [shape: f32[8,32], index: 4, kind: input, shape index: {}]
  %s5 = inlined_call_operand.vmem [shape: f32[128,32], index: 5, kind: input, shape index: {}]
  %s6 = inlined_call_operand.vmem [shape: f32[1,32], index: 6, kind: input, shape index: {}]
  %s7 = inlined_call_operand.vmem [shape: f32[32,128], index: 7, kind: input, shape index: {}]
  %s8 = inlined_call_operand.vmem [shape: f32[1,128], index: 8, kind: input, shape index: {}]
  %s9 = inlined_call_operand.hbm [shape: f32[2,128], index: 9, kind: output, shape index: {0}]
  %s10 = inlined_call_operand.hbm [shape: f32[2,256], index: 10, kind: output, shape index: {1}]
  %11 = xla_tuple %s9, %s10
  %s12 = sld [smem:[#allocation0]]
  $region54: #{tpu_custom_call.1} parent=0
    _
  %s14 = ssub.s32 1, %s12
  %s15 = scalar_select 0, %s14, %s12
  $region1: #{tpu_custom_call.1} parent=0
    #allocation2 [shape = 'u8[1024]{0}', space=vmem, size = 0x400, scoped, tag = 'output window, operand 0, single buffered']
    #allocation3 [shape = 's32[1]{0}', space=sflag, size = 0x4, scoped, tag = 'scoped memory for tpu_custom_call.1']
    #allocation4 [shape = 'u8[2048]{0}', space=vmem, size = 0x800, scoped, tag = 'output window, operand 1, single buffered']
    #allocation5 [shape = 's32[1]{0}', space=sflag, size = 0x4, scoped, tag = 'scoped memory for tpu_custom_call.1']
    %16 = vsyncpa [#allocation3], 0
    %17 = vsyncpa [#allocation5], 0
    // Predicated region
    $region2: #{tpu_custom_call.1} parent=1 // pred_check
      _
    $region3: #{tpu_custom_call.1} parent=1 // pred_check_branch
      %19 = sbr.rel (0) target = $region5
    $region4: #{tpu_custom_call.1} parent=1 // pred_region
      _
    $region5: #{tpu_custom_call.1} parent=1 // pred_fallthru
      _
    // Predicated region
    $region6: #{tpu_custom_call.1} parent=1 // pred_check
      _
    $region7: #{tpu_custom_call.1} parent=1 // pred_check_branch
      %21 = sbr.rel (0) target = $region9
    $region8: #{tpu_custom_call.1} parent=1 // pred_region
      _
    $region9: #{tpu_custom_call.1} parent=1 // pred_fallthru
      _
    // Predicated region
    $region10: #{tpu_custom_call.1} parent=1 // pred_check
      _
    $region11: #{tpu_custom_call.1} parent=1 // pred_check_branch
      %23 = sbr.rel (0) target = $region13
    $region12: #{tpu_custom_call.1} parent=1 // pred_region
      _
    $region13: #{tpu_custom_call.1} parent=1 // pred_fallthru
      _
    // Predicated region
    $region14: #{tpu_custom_call.1} parent=1 // pred_check
      _
    $region15: #{tpu_custom_call.1} parent=1 // pred_check_branch
      %25 = sbr.rel (0) target = $region17
    $region16: #{tpu_custom_call.1} parent=1 // pred_region
      _
    $region17: #{tpu_custom_call.1} parent=1 // pred_fallthru
      _
    // Predicated region
    $region18: #{tpu_custom_call.1} parent=1 // pred_check
      _
    $region19: #{tpu_custom_call.1} parent=1 // pred_check_branch
      %27 = sbr.rel (0) target = $region21
    $region20: #{tpu_custom_call.1} parent=1 // pred_region
      _
    $region21: #{tpu_custom_call.1} parent=1 // pred_fallthru
      _
    // Predicated region
    $region22: #{tpu_custom_call.1} parent=1 // pred_check
      _
    $region23: #{tpu_custom_call.1} parent=1 // pred_check_branch
      %29 = sbr.rel (0) target = $region25
    $region24: #{tpu_custom_call.1} parent=1 // pred_region
      _
    $region25: #{tpu_custom_call.1} parent=1 // pred_fallthru
      _
    // Predicated region
    $region26: #{tpu_custom_call.1} parent=1 // pred_check
      _
    $region27: #{tpu_custom_call.1} parent=1 // pred_check_branch
      %31 = sbr.rel (0) target = $region29
    $region28: #{tpu_custom_call.1} parent=1 // pred_region
      _
    $region29: #{tpu_custom_call.1} parent=1 // pred_fallthru
      _
    // Predicated region
    $region30: #{tpu_custom_call.1} parent=1 // pred_check
      _
    $region31: #{tpu_custom_call.1} parent=1 // pred_check_branch
      %33 = sbr.rel (0) target = $region33
    $region32: #{tpu_custom_call.1} parent=1 // pred_region
      _
    $region33: #{tpu_custom_call.1} parent=1 // pred_fallthru
      _
    // Predicated region
    $region34: #{tpu_custom_call.1} parent=1 // pred_check
      _
    $region35: #{tpu_custom_call.1} parent=1 // pred_check_branch
      %35 = sbr.rel (0) target = $region37
    $region36: #{tpu_custom_call.1} parent=1 // pred_region
      _
    $region37: #{tpu_custom_call.1} parent=1 // pred_fallthru
      _
    %v36 = vld [vmem:[%s0] sm:$0xff]
    %v37 = vld [vmem:[%s0 + $0x8] sm:$0xff]
    %v38 = vld [vmem:[%s2] sm:$0x3]
    %vm39 = vcmask 64512
    %v41 = vsel %vm39, %v38, 0
    %43 = vmatprep.subr.mxu0 %v37
    %44 = vmatpush1.msra.mxu0 %v36
    %45 = vmatprep.subr.mxu0 0.0
    %46 = vmatpush1.msra.mxu0 0.0
    %47 = vmatprep.subr.mxu0 0.0
    %48 = vmatpush1.msra.mxu0 0.0
    %49 = vmatprep.subr.mxu0 0.0
    %50 = vmatpush1.msra.mxu0 0.0
    %51 = vmatprep.subr.mxu0 0.0
    %52 = vmatpush1.msra.mxu0 0.0
    %53 = vmatprep.subr.mxu0 0.0
    %54 = vmatpush1.msra.mxu0 0.0
    %55 = vmatprep.subr.mxu0 0.0
    %56 = vmatpush1.msra.mxu0 0.0
    %57 = vmatprep.subr.mxu0 0.0
    %58 = vmatpush1.msra.mxu0 0.0
    %59 = vmatprep.subr.mxu0 0.0
    %60 = vmatpush1.msra.mxu0 0.0
    %61 = vmatprep.subr.mxu0 0.0
    %62 = vmatpush1.msra.mxu0 0.0
    %63 = vmatprep.subr.mxu0 0.0
    %64 = vmatpush1.msra.mxu0 0.0
    %65 = vmatprep.subr.mxu0 0.0
    %66 = vmatpush1.msra.mxu0 0.0
    %67 = vmatprep.subr.mxu0 0.0
    %68 = vmatpush1.msra.mxu0 0.0
    %69 = vmatprep.subr.mxu0 0.0
    %70 = vmatpush1.msra.mxu0 0.0
    %71 = vmatprep.subr.mxu0 0.0
    %72 = vmatpush1.msra.mxu0 0.0
    %73 = vmatprep.subr.mxu0 0.0
    %74 = vmatpush1.msra.mxu0 0.0
    %75 = vmatprep.subr.mxu0 0.0
    %76 = vmatpush1.msra.mxu0 0.0
    %77 = vmatprep.subr.mxu0 0.0
    %78 = vmatpush1.msra.mxu0 0.0
    %79 = vmatprep.subr.mxu0 0.0
    %80 = vmatpush1.msra.mxu0 0.0
    %81 = vmatprep.subr.mxu0 0.0
    %82 = vmatpush1.msra.mxu0 0.0
    %83 = vmatprep.subr.mxu0 0.0
    %84 = vmatpush1.msra.mxu0 0.0
    %85 = vmatprep.subr.mxu0 0.0
    %86 = vmatpush1.msra.mxu0 0.0
    %87 = vmatprep.subr.mxu0 0.0
    %88 = vmatpush1.msra.mxu0 0.0
    %89 = vmatprep.subr.mxu0 0.0
    %90 = vmatpush1.msra.mxu0 0.0
    %91 = vmatprep.subr.mxu0 0.0
    %92 = vmatpush1.msra.mxu0 0.0
    %93 = vmatprep.subr.mxu0 0.0
    %94 = vmatpush1.msra.mxu0 0.0
    %95 = vmatprep.subr.mxu0 0.0
    %96 = vmatpush1.msra.mxu0 0.0
    %97 = vmatprep.subr.mxu0 0.0
    %98 = vmatpush1.msra.mxu0 0.0
    %99 = vmatprep.subr.mxu0 0.0
    %100 = vmatpush1.msra.mxu0 0.0
    %101 = vmatprep.subr.mxu0 0.0
    %102 = vmatpush1.msra.mxu0 0.0
    %103 = vmatprep.subr.mxu0 0.0
    %104 = vmatpush1.msra.mxu0 0.0
    %105 = vmatprep.subr.mxu0 0.0
    %106 = vmatpush1.msra.mxu0 0.0
    %107 = vmatprep.mubr.f32.mxu0 0.0
    %108 = vmatmul.mubr.f32.gmra.mrb[0].mxu0 %v41
    %v109 = vpop.f32.mrb[0].mxu0
    %v110 = vadd.f32 0.0, %v109
    %v111 = vpop.f32.mrb[0].mxu0
    %v112 = vadd.f32 0.0, %v111
    %113 = vdwg.mxu0
    %vm114 = vcmask 1041408
    %v115 = vsel %vm114, %v110, -inf
    %v116 = vsel %vm114, %v112, -inf
    %v117 = vmax.f32 %v115, %v116
    %118 = vmax.xlane.f32.xlu0 %v117
    %v119 = vpop.xlane.xlu0 %118
    %v120 = vsub.f32 %v110, %v119
    %v121 = vsub.f32 %v112, %v119
    %v122 = vmul.f32 %v120, 1.442695
    %v123 = vpow.pop %v122
    %v124 = vmul.f32 %v121, 1.442695
    %v125 = vpow.pop %v124
    %v126 = vsel %vm114, %v123, 0.0
    %v127 = vsel %vm114, %v125, 0.0
    %v128 = vadd.f32 %v126, %v127
    %129 = vadd.xlane.f32.xlu0 %v128
    %v130 = vpop.xlane.xlu0 %129
    %v131 = vrcp.pop %v130
    %v132 = vmul.f32 %v123, %v131
    %v133 = vmul.f32 %v125, %v131
    %v136 = vcombine.low %v132, %v133
    %v138 = vunpack.c.l.s4 1983009808
    %v139 = vunpack.c.0.s8 %v138
    %v140 = vlaneseq
    %v141 = vshrl.u32 %v140, 7
    %v142 = vsub.s32 %v139, %v141
    %v143 = vrot.slane %v136, %v142
    %145 = vst [vmem:[#allocation4] sm:$0xf] %v143
    %v146 = vadd.f32 %v36, %v37
    %147 = vadd.xlane.f32.xlu0 %v146
    %v148 = vpop.xlane.xlu0 %147
    %v149 = vld [vmem:[%s3] sm:$0x3]
    %v150 = vld [vmem:[%s4] sm:$0xff]
    %v151 = vmul.f32 %v148, %v150
    %v152 = vld [vmem:[%s1] sm:$0x3]
    %v153 = vld [vmem:[%s5] sm:$0xff]
    %v154 = vld [vmem:[%s5 + $0x8] sm:$0xff]
    %v155 = vld [vmem:[%s5 + $0x10] sm:$0xff]
    %v156 = vld [vmem:[%s5 + $0x18] sm:$0xff]
    %v157 = vld [vmem:[%s5 + $0x20] sm:$0xff]
    %v158 = vld [vmem:[%s5 + $0x28] sm:$0xff]
    %v159 = vld [vmem:[%s5 + $0x30] sm:$0xff]
    %v160 = vld [vmem:[%s5 + $0x38] sm:$0xff]
    %v161 = vld [vmem:[%s5 + $0x40] sm:$0xff]
    %v162 = vld [vmem:[%s5 + $0x48] sm:$0xff]
    %v163 = vld [vmem:[%s5 + $0x50] sm:$0xff]
    %v164 = vld [vmem:[%s5 + $0x58] sm:$0xff]
    %v165 = vld [vmem:[%s5 + $0x60] sm:$0xff]
    %v166 = vld [vmem:[%s5 + $0x68] sm:$0xff]
    %v167 = vld [vmem:[%s5 + $0x70] sm:$0xff]
    %v168 = vld [vmem:[%s5 + $0x78] sm:$0xff]
    %169 = vmatprep.subr.mxu0 0.0
    %170 = vmatpush1.msra.mxu0 %v153
    %171 = vmatprep.subr.mxu0 0.0
    %172 = vmatpush1.msra.mxu0 %v154
    %173 = vmatprep.subr.mxu0 0.0
    %174 = vmatpush1.msra.mxu0 %v155
    %175 = vmatprep.subr.mxu0 0.0
    %176 = vmatpush1.msra.mxu0 %v156
    %177 = vmatprep.subr.mxu0 0.0
    %178 = vmatpush1.msra.mxu0 %v157
    %179 = vmatprep.subr.mxu0 0.0
    %180 = vmatpush1.msra.mxu0 %v158
    %181 = vmatprep.subr.mxu0 0.0
    %182 = vmatpush1.msra.mxu0 %v159
    %183 = vmatprep.subr.mxu0 0.0
    %184 = vmatpush1.msra.mxu0 %v160
    %185 = vmatprep.subr.mxu0 0.0
    %186 = vmatpush1.msra.mxu0 %v161
    %187 = vmatprep.subr.mxu0 0.0
    %188 = vmatpush1.msra.mxu0 %v162
    %189 = vmatprep.subr.mxu0 0.0
    %190 = vmatpush1.msra.mxu0 %v163
    %191 = vmatprep.subr.mxu0 0.0
    %192 = vmatpush1.msra.mxu0 %v164
    %193 = vmatprep.subr.mxu0 0.0
    %194 = vmatpush1.msra.mxu0 %v165
    %195 = vmatprep.subr.mxu0 0.0
    %196 = vmatpush1.msra.mxu0 %v166
    %197 = vmatprep.subr.mxu0 0.0
    %198 = vmatpush1.msra.mxu0 %v167
    %199 = vmatprep.subr.mxu0 0.0
    %200 = vmatpush1.msra.mxu0 %v168
    %201 = vmatprep.subr.mxu0 0.0
    %202 = vmatpush1.msra.mxu0 0.0
    %203 = vmatprep.subr.mxu0 0.0
    %204 = vmatpush1.msra.mxu0 0.0
    %205 = vmatprep.subr.mxu0 0.0
    %206 = vmatpush1.msra.mxu0 0.0
    %207 = vmatprep.subr.mxu0 0.0
    %208 = vmatpush1.msra.mxu0 0.0
    %209 = vmatprep.subr.mxu0 0.0
    %210 = vmatpush1.msra.mxu0 0.0
    %211 = vmatprep.subr.mxu0 0.0
    %212 = vmatpush1.msra.mxu0 0.0
    %213 = vmatprep.subr.mxu0 0.0
    %214 = vmatpush1.msra.mxu0 0.0
    %215 = vmatprep.subr.mxu0 0.0
    %216 = vmatpush1.msra.mxu0 0.0
    %217 = vmatprep.subr.mxu0 0.0
    %218 = vmatpush1.msra.mxu0 0.0
    %219 = vmatprep.subr.mxu0 0.0
    %220 = vmatpush1.msra.mxu0 0.0
    %221 = vmatprep.subr.mxu0 0.0
    %222 = vmatpush1.msra.mxu0 0.0
    %223 = vmatprep.subr.mxu0 0.0
    %224 = vmatpush1.msra.mxu0 0.0
    %225 = vmatprep.subr.mxu0 0.0
    %226 = vmatpush1.msra.mxu0 0.0
    %227 = vmatprep.subr.mxu0 0.0
    %228 = vmatpush1.msra.mxu0 0.0
    %229 = vmatprep.subr.mxu0 0.0
    %230 = vmatpush1.msra.mxu0 0.0
    %231 = vmatprep.subr.mxu0 0.0
    %232 = vmatpush1.msra.mxu0 0.0
    %233 = vmatprep.mubr.f32.mxu0 0.0
    %234 = vmatmul.mubr.f32.gmra.mrb[0].mxu0 %v152
    %v235 = vpop.f32.mrb[0].mxu0
    %v236 = vadd.f32 0.0, %v235
    %v237 = vpop.f32.mrb[0].mxu0
    %238 = vdwg.mxu0
    %v240 = vsel %vm39, %v149, 0
    %242 = vmatprep.subr.mxu0 0.0
    %243 = vmatpush1.msra.mxu0 %v151
    %244 = vmatprep.subr.mxu0 0.0
    %245 = vmatpush1.msra.mxu0 0.0
    %246 = vmatprep.subr.mxu0 0.0
    %247 = vmatpush1.msra.mxu0 0.0
    %248 = vmatprep.subr.mxu0 0.0
    %249 = vmatpush1.msra.mxu0 0.0
    %250 = vmatprep.subr.mxu0 0.0
    %251 = vmatpush1.msra.mxu0 0.0
    %252 = vmatprep.subr.mxu0 0.0
    %253 = vmatpush1.msra.mxu0 0.0
    %254 = vmatprep.subr.mxu0 0.0
    %255 = vmatpush1.msra.mxu0 0.0
    %256 = vmatprep.subr.mxu0 0.0
    %257 = vmatpush1.msra.mxu0 0.0
    %258 = vmatprep.subr.mxu0 0.0
    %259 = vmatpush1.msra.mxu0 0.0
    %260 = vmatprep.subr.mxu0 0.0
    %261 = vmatpush1.msra.mxu0 0.0
    %262 = vmatprep.subr.mxu0 0.0
    %263 = vmatpush1.msra.mxu0 0.0
    %264 = vmatprep.subr.mxu0 0.0
    %265 = vmatpush1.msra.mxu0 0.0
    %266 = vmatprep.subr.mxu0 0.0
    %267 = vmatpush1.msra.mxu0 0.0
    %268 = vmatprep.subr.mxu0 0.0
    %269 = vmatpush1.msra.mxu0 0.0
    %270 = vmatprep.subr.mxu0 0.0
    %271 = vmatpush1.msra.mxu0 0.0
    %272 = vmatprep.subr.mxu0 0.0
    %273 = vmatpush1.msra.mxu0 0.0
    %274 = vmatprep.subr.mxu0 0.0
    %275 = vmatpush1.msra.mxu0 0.0
    %276 = vmatprep.subr.mxu0 0.0
    %277 = vmatpush1.msra.mxu0 0.0
    %278 = vmatprep.subr.mxu0 0.0
    %279 = vmatpush1.msra.mxu0 0.0
    %280 = vmatprep.subr.mxu0 0.0
    %281 = vmatpush1.msra.mxu0 0.0
    %282 = vmatprep.subr.mxu0 0.0
    %283 = vmatpush1.msra.mxu0 0.0
    %284 = vmatprep.subr.mxu0 0.0
    %285 = vmatpush1.msra.mxu0 0.0
    %286 = vmatprep.subr.mxu0 0.0
    %287 = vmatpush1.msra.mxu0 0.0
    %288 = vmatprep.subr.mxu0 0.0
    %289 = vmatpush1.msra.mxu0 0.0
    %290 = vmatprep.subr.mxu0 0.0
    %291 = vmatpush1.msra.mxu0 0.0
    %292 = vmatprep.subr.mxu0 0.0
    %293 = vmatpush1.msra.mxu0 0.0
    %294 = vmatprep.subr.mxu0 0.0
    %295 = vmatpush1.msra.mxu0 0.0
    %296 = vmatprep.subr.mxu0 0.0
    %297 = vmatpush1.msra.mxu0 0.0
    %298 = vmatprep.subr.mxu0 0.0
    %299 = vmatpush1.msra.mxu0 0.0
    %300 = vmatprep.subr.mxu0 0.0
    %301 = vmatpush1.msra.mxu0 0.0
    %302 = vmatprep.subr.mxu0 0.0
    %303 = vmatpush1.msra.mxu0 0.0
    %304 = vmatprep.subr.mxu0 0.0
    %305 = vmatpush1.msra.mxu0 0.0
    %306 = vmatprep.mubr.f32.mxu0 0.0
    %307 = vmatmul.mubr.f32.gmra.mrb[0].mxu0 %v240
    %v308 = vpop.f32.mrb[0].mxu0
    %v309 = vadd.f32 %v236, %v308
    %v310 = vpop.f32.mrb[0].mxu0
    %311 = vdwg.mxu0
    %v312 = vld [vmem:[%s6] sm:$0x1]
    %v314 = vlaneseq
    %v315 = vshrl.u32 %v314, 7
    %v316 = vsub.s32 0, %v315
    %v317 = vrot.slane %v312, %v316
    %v319 = vadd.f32 %v309, %v317
    %v320 = vmax.f32 %v319, 0.0
    %v321 = vld [vmem:[%s7] sm:$0xff]
    %v322 = vld [vmem:[%s7 + $0x8] sm:$0xff]
    %v323 = vld [vmem:[%s7 + $0x10] sm:$0xff]
    %v324 = vld [vmem:[%s7 + $0x18] sm:$0xff]
    %v325 = vld [vmem:[%s8] sm:$0x1]
    %v327 = vlaneseq
    %v328 = vshrl.u32 %v327, 7
    %v329 = vsub.s32 0, %v328
    %v330 = vrot.slane %v325, %v329
    %vm332 = vcmask 261120
    %v334 = vsel %vm332, %v320, 0
    %336 = vmatprep.subr.mxu0 0.0
    %337 = vmatpush1.msra.mxu0 %v321
    %338 = vmatprep.subr.mxu0 0.0
    %339 = vmatpush1.msra.mxu0 %v322
    %340 = vmatprep.subr.mxu0 0.0
    %341 = vmatpush1.msra.mxu0 %v323
    %342 = vmatprep.subr.mxu0 0.0
    %343 = vmatpush1.msra.mxu0 %v324
    %344 = vmatprep.subr.mxu0 0.0
    %345 = vmatpush1.msra.mxu0 0.0
    %346 = vmatprep.subr.mxu0 0.0
    %347 = vmatpush1.msra.mxu0 0.0
    %348 = vmatprep.subr.mxu0 0.0
    %349 = vmatpush1.msra.mxu0 0.0
    %350 = vmatprep.subr.mxu0 0.0
    %351 = vmatpush1.msra.mxu0 0.0
    %352 = vmatprep.subr.mxu0 0.0
    %353 = vmatpush1.msra.mxu0 0.0
    %354 = vmatprep.subr.mxu0 0.0
    %355 = vmatpush1.msra.mxu0 0.0
    %356 = vmatprep.subr.mxu0 0.0
    %357 = vmatpush1.msra.mxu0 0.0
    %358 = vmatprep.subr.mxu0 0.0
    %359 = vmatpush1.msra.mxu0 0.0
    %360 = vmatprep.subr.mxu0 0.0
    %361 = vmatpush1.msra.mxu0 0.0
    %362 = vmatprep.subr.mxu0 0.0
    %363 = vmatpush1.msra.mxu0 0.0
    %364 = vmatprep.subr.mxu0 0.0
    %365 = vmatpush1.msra.mxu0 0.0
    %366 = vmatprep.subr.mxu0 0.0
    %367 = vmatpush1.msra.mxu0 0.0
    %368 = vmatprep.subr.mxu0 0.0
    %369 = vmatpush1.msra.mxu0 0.0
    %370 = vmatprep.subr.mxu0 0.0
    %371 = vmatpush1.msra.mxu0 0.0
    %372 = vmatprep.subr.mxu0 0.0
    %373 = vmatpush1.msra.mxu0 0.0
    %374 = vmatprep.subr.mxu0 0.0
    %375 = vmatpush1.msra.mxu0 0.0
    %376 = vmatprep.subr.mxu0 0.0
    %377 = vmatpush1.msra.mxu0 0.0
    %378 = vmatprep.subr.mxu0 0.0
    %379 = vmatpush1.msra.mxu0 0.0
    %380 = vmatprep.subr.mxu0 0.0
    %381 = vmatpush1.msra.mxu0 0.0
    %382 = vmatprep.subr.mxu0 0.0
    %383 = vmatpush1.msra.mxu0 0.0
    %384 = vmatprep.subr.mxu0 0.0
    %385 = vmatpush1.msra.mxu0 0.0
    %386 = vmatprep.subr.mxu0 0.0
    %387 = vmatpush1.msra.mxu0 0.0
    %388 = vmatprep.subr.mxu0 0.0
    %389 = vmatpush1.msra.mxu0 0.0
    %390 = vmatprep.subr.mxu0 0.0
    %391 = vmatpush1.msra.mxu0 0.0
    %392 = vmatprep.subr.mxu0 0.0
    %393 = vmatpush1.msra.mxu0 0.0
    %394 = vmatprep.subr.mxu0 0.0
    %395 = vmatpush1.msra.mxu0 0.0
    %396 = vmatprep.subr.mxu0 0.0
    %397 = vmatpush1.msra.mxu0 0.0
    %398 = vmatprep.subr.mxu0 0.0
    %399 = vmatpush1.msra.mxu0 0.0
    %400 = vmatprep.mubr.f32.mxu0 0.0
    %401 = vmatmul.mubr.f32.gmra.mrb[0].mxu0 %v334
    %v402 = vpop.f32.mrb[0].mxu0
    %v403 = vadd.f32 %v330, %v402
    %v404 = vpop.f32.mrb[0].mxu0
    %405 = vdwg.mxu0
    %v406 = vsel %vm114, %v403, -inf
    %407 = vmax.xlane.f32.xlu0 %v406
    %v408 = vpop.xlane.xlu0 %407
    %v409 = vsub.f32 %v403, %v408
    %v410 = vmul.f32 %v409, 1.442695
    %v411 = vpow.pop %v410
    %v412 = vsel %vm114, %v411, 0.0
    %413 = vadd.xlane.f32.xlu0 %v412
    %v414 = vpop.xlane.xlu0 %413
    %v415 = vrcp.pop %v414
    %v416 = vmul.f32 %v411, %v415
    %417 = vst [vmem:[#allocation2] sm:$0x3] %v416
    // Predicated region
    $region38: #{tpu_custom_call.1} parent=1 // pred_check
      _
    $region39: #{tpu_custom_call.1} parent=1 // pred_check_branch
      %419 = sbr.rel (0) target = $region41
    $region40: #{tpu_custom_call.1} parent=1 // pred_region
      %s421 = ssub.s32 32, 32
      %422 = vsyncadd [#allocation3], %s421
      %s424 = sshll.u32 [#allocation2], 4
      %s425 = int_to_ptr.vmem [resolvable:$true] %s424
      %427 = dma.vmem_to_hbm [thread:$0]  %s425, 32, %s9, [#allocation3]
    $region41: #{tpu_custom_call.1} parent=1 // pred_fallthru
      _
    // Predicated region
    $region42: #{tpu_custom_call.1} parent=1 // pred_check
      _
    $region43: #{tpu_custom_call.1} parent=1 // pred_check_branch
      %429 = sbr.rel (0) target = $region45
    $region44: #{tpu_custom_call.1} parent=1 // pred_region
      %s431 = ssub.s32 64, 64
      %432 = vsyncadd [#allocation5], %s431
      %s434 = sshll.u32 [#allocation4], 4
      %s435 = int_to_ptr.vmem [resolvable:$true] %s434
      %437 = dma.vmem_to_hbm [thread:$0]  %s435, 64, %s10, [#allocation5]
    $region45: #{tpu_custom_call.1} parent=1 // pred_fallthru
      _
    // Predicated region
    $region46: #{tpu_custom_call.1} parent=1 // pred_check
      _
    $region47: #{tpu_custom_call.1} parent=1 // pred_check_branch
      %439 = sbr.rel (0) target = $region49
    $region48: #{tpu_custom_call.1} parent=1 // pred_region
      %440 = dma.done [#allocation3], 32
    $region49: #{tpu_custom_call.1} parent=1 // pred_fallthru
      _
    // Predicated region
    $region50: #{tpu_custom_call.1} parent=1 // pred_check
      _
    $region51: #{tpu_custom_call.1} parent=1 // pred_check_branch
      %442 = sbr.rel (0) target = $region53
    $region52: #{tpu_custom_call.1} parent=1 // pred_region
      %443 = dma.done [#allocation5], 64
    $region53: #{tpu_custom_call.1} parent=1 // pred_fallthru
      _
    %444 = vsyncpa [#allocation3], 1
    %445 = vsyncpa [#allocation5], 1

</llo_original>
